<compile_context>
chip_gen: v6e
topology: v6e:2x2x1
jax: 0.10.0
libtpu: 0.0.40
codegen_flags: <defaults>
</compile_context>

<pallas_src>
import functools

import jax
import jax.numpy as jnp
from jax.experimental import pallas as pl
from jax.experimental.pallas import tpu as pltpu


def _layernorm(x, gamma, beta, eps=1e-5):
    # PyTorch LayerNorm: biased variance, eps inside sqrt.
    mu = jnp.mean(x, axis=-1, keepdims=True)
    var = jnp.mean((x - mu) ** 2, axis=-1, keepdims=True)
    return (x - mu) * jax.lax.rsqrt(var + eps) * gamma + beta


def tblock_kernel(x_ref,
                  wqkv_ref, bqkv_ref,
                  wfc_ref, bfc_ref,
                  g1_ref, be1_ref,
                  w1_ref, b1_ref, w2_ref, b2_ref,
                  g2_ref, be2_ref,
                  o_ref, *, heads, t):
    m, k = x_ref.shape            # rows in this slab, feature dim
    tb = m // t                   # batch elements in this slab
    hk = heads * k

    x2 = x_ref[...]                               # (m, k) f32 (residuals / LN)
    xb = x2.astype(jnp.bfloat16)

    # ---- fused QKV projection: ONE (m, k) x (k, 3*H*k) MXU matmul.
    #      k**-0.25 scaling for q/k is pre-folded into wqkv / bqkv in the wrapper.
    qkv = (jnp.dot(xb, wqkv_ref[...], preferred_element_type=jnp.float32)
           + bqkv_ref[...]).astype(jnp.bfloat16)  # (m, 3*H*k) bf16 slab

    # ---- regroup into per-(head, batch) attention groups of (t, k).
    #      Static lane slices per head; the (m -> tb, t) row split is
    #      layout-preserving (t is a multiple of the 8-sublane tile).
    def groups(base):
        sl = [qkv[:, base + h * k: base + (h + 1) * k] for h in range(heads)]
        return jnp.stack(sl, axis=0).reshape(heads * tb, t, k)   # (g, t, k) bf16

    qg = groups(0)
    kg = groups(hk)
    vg = groups(2 * hk)

    # ---- Thiccatten: scores[g, i, j] = key_i . query_j (contract shared k axis),
    #      softmax over the *query* axis j (torch dim=2).
    s = jnp.einsum('gik,gjk->gij', kg, qg, preferred_element_type=jnp.float32)
    s = s - jnp.max(s, axis=-1, keepdims=True)
    p = jnp.exp(s)                                     # f32
    denom = jnp.sum(p, axis=-1, keepdims=True)         # (g, t, 1) f32

    ho = jnp.einsum('gij,gjd->gid', p.astype(jnp.bfloat16), vg,
                    preferred_element_type=jnp.float32)
    # deferred softmax normalization applied to the small (t, k) head output
    ho = ho * pl.reciprocal(denom, approx=True)        # (g, t, k) f32

    # ---- output projection: lane-concat heads -> (m, H*k), ONE 128-deep dot.
    ho = ho.reshape(heads, m, k)                       # layout-preserving
    att_in = jnp.concatenate([ho[h] for h in range(heads)], axis=-1)  # (m, H*k)
    attended = jnp.dot(att_in.astype(jnp.bfloat16), wfc_ref[...],
                       preferred_element_type=jnp.float32) + bfc_ref[...]  # (m, k)

    # ---- residual + LayerNorm 1 (f32)
    x1 = _layernorm(attended + x2, g1_ref[...], be1_ref[...])

    # ---- feed-forward k -> 4k -> k with ReLU (bf16 MXU operands, f32 accumulate)
    h1 = jnp.dot(x1.astype(jnp.bfloat16), w1_ref[...],
                 preferred_element_type=jnp.float32) + b1_ref[...]
    h1 = jnp.maximum(h1, 0.0)
    ff = jnp.dot(h1.astype(jnp.bfloat16), w2_ref[...],
                 preferred_element_type=jnp.float32) + b2_ref[...]

    # ---- residual + LayerNorm 2 (f32)
    out2 = _layernorm(ff + x1, g2_ref[...], be2_ref[...])
    o_ref[...] = out2.astype(o_ref.dtype)


def _auto_block_b(b, t, target_rows=2048):
    """Largest divisor of b whose slab stays near target_rows, preferring >=2
    grid steps (keeps both v7x TensorCores busy; ~free on single-TC parts)."""
    divs = [d for d in range(1, b + 1) if b % d == 0]
    cands = [d for d in divs if d * t <= target_rows and b // d >= 2]
    if not cands:
        cands = [d for d in divs if d * t <= target_rows]
    if not cands:
        cands = [1]
    return max(cands)


def tblock_forward(x, params, heads, *, block_b=None, mxu_dtype=jnp.bfloat16):
    b, t, k = x.shape
    assert t % 8 == 0, "kernel assumes seq length is a multiple of the 8-sublane tile"
    hk = heads * k
    inv_scale = 1.0 / (k ** 0.25)

    # ---- weight prep (once, outside the kernel, plain JAX):
    #  * fused QKV weight/bias in the original (k, H*k) column layout
    #  * fold the k**-0.25 q/k scaling into weights + biases
    #  * cast MXU weight operands to bf16
    wqkv = jnp.concatenate([params["wq"] * inv_scale,
                            params["wk"] * inv_scale,
                            params["wv"]], axis=1).astype(mxu_dtype)      # (k, 3Hk)
    bqkv = jnp.concatenate([params["bq"] * inv_scale,
                            params["bk"] * inv_scale,
                            params["bv"]], axis=1).astype(jnp.float32)    # (1, 3Hk)
    wfc = params["wfc"].astype(mxu_dtype)                                 # (Hk, k)
    w1 = params["w1"].astype(mxu_dtype)
    w2 = params["w2"].astype(mxu_dtype)

    param_arrays = [wqkv, bqkv,
                    wfc, params["bfc"].astype(jnp.float32),
                    params["g1"], params["be1"],
                    w1, params["b1"].astype(jnp.float32),
                    w2, params["b2"].astype(jnp.float32),
                    params["g2"], params["be2"]]

    if block_b is None:
        block_b = _auto_block_b(b, t)
    assert b % block_b == 0
    block_m = block_b * t
    grid = (b // block_b,)

    x_rows = x.reshape(b * t, k)          # row-slab layout for the kernel

    def full_spec(a):
        n = a.ndim
        return pl.BlockSpec(a.shape, lambda i, _n=n: (0,) * _n)

    in_specs = [pl.BlockSpec((block_m, k), lambda i: (i, 0))]   # x row slab
    in_specs += [full_spec(a) for a in param_arrays]

    # ---- advisory cost estimate (helps XLA schedule/overlap the call)
    M = b * t
    flops = (2 * M * k * (3 * hk)          # fused QKV
             + 2 * (b * heads) * t * t * k * 2   # scores + PV
             + 2 * M * hk * k              # output projection
             + 2 * M * k * (4 * k) * 2)    # FFN
    transcendentals = b * heads * t * t + 2 * M
    param_bytes = sum(int(a.size) * jnp.dtype(a.dtype).itemsize for a in param_arrays)
    bytes_accessed = 2 * M * k * 4 + param_bytes * (b // block_b)

    kernel = functools.partial(tblock_kernel, heads=heads, t=t)

    out_rows = pl.pallas_call(
        kernel,
        out_shape=jax.ShapeDtypeStruct((b * t, k), x.dtype),
        grid_spec=pltpu.PrefetchScalarGridSpec(
            num_scalar_prefetch=0,
            grid=grid,
            in_specs=in_specs,
            out_specs=pl.BlockSpec((block_m, k), lambda i: (i, 0)),
        ),
        compiler_params=pltpu.CompilerParams(
            dimension_semantics=("parallel",),
            vmem_limit_bytes=32 * 1024 * 1024,   # explicit; safe on v5e/v6e/v7x
        ),
        cost_estimate=pl.CostEstimate(
            flops=int(flops),
            transcendentals=int(transcendentals),
            bytes_accessed=int(bytes_accessed)),
    )(x_rows, *param_arrays)

    return out_rows.reshape(b, t, k)


# ---------------- pure-JAX reference (mirrors the torch code, f32) ----------------
def tblock_reference(x, params, heads):
    b, t, k = x.shape
    q = x @ params["wq"] + params["bq"]            # (b, t, h*k)
    kk = x @ params["wk"] + params["bk"]
    v = x @ params["wv"] + params["bv"]

    def split(a):   # (b, t, h*k) -> (b, h, t, k)
        return a.reshape(b, t, heads, k).transpose(0, 2, 1, 3)

    q, kk, v = split(q), split(kk), split(v)
    scale = k ** 0.25
    q = q / scale
    kk = kk / scale
    dot = jnp.einsum("bhik,bhjk->bhij", kk, q)     # keys @ queries^T
    p = jax.nn.softmax(dot, axis=-1)               # softmax over query axis (torch dim=2)
    out = jnp.einsum("bhij,bhjk->bhik", p, v)      # (b, h, t, k)
    out = out.transpose(0, 2, 1, 3).reshape(b, t, heads * k)
    attended = out @ params["wfc"] + params["bfc"]

    x1 = _layernorm(attended + x, params["g1"], params["be1"])
    h1 = jnp.maximum(x1 @ params["w1"] + params["b1"], 0.0)
    ff = h1 @ params["w2"] + params["b2"]
    return _layernorm(ff + x1, params["g2"], params["be2"])


if __name__ == "__main__":
    b, t, k, heads = 2, 8, 32, 4

    key = jax.random.PRNGKey(0)
    ks = jax.random.split(key, 16)

    def init(kk, shape, scale=0.05):
        return jax.random.normal(kk, shape, dtype=jnp.float32) * scale

    x = init(ks[0], (b, t, k), scale=1.0)

    params = {
        # attention projections (stored as (in, out)); biases as (1, out) rows
        "wq":  init(ks[1], (k, k * heads)), "bq":  init(ks[2], (1, k * heads)),
        "wk":  init(ks[3], (k, k * heads)), "bk":  init(ks[4], (1, k * heads)),
        "wv":  init(ks[5], (k, k * heads)), "bv":  init(ks[6], (1, k * heads)),
        "wfc": init(ks[7], (k * heads, k)), "bfc": init(ks[8], (1, k)),
        # LayerNorm 1 (PyTorch default init: weight=1, bias=0)
        "g1":  jnp.ones((1, k), jnp.float32), "be1": jnp.zeros((1, k), jnp.float32),
        # feed-forward
        "w1":  init(ks[9],  (k, 4 * k)),  "b1": init(ks[10], (1, 4 * k)),
        "w2":  init(ks[11], (4 * k, k)),  "b2": init(ks[12], (1, k)),
        # LayerNorm 2
        "g2":  jnp.ones((1, k), jnp.float32), "be2": jnp.zeros((1, k), jnp.float32),
    }

    out = tblock_forward(x, params, heads)
    out = jax.block_until_ready(out)

    ref = tblock_reference(x, params, heads)
    assert out.shape == (b, t, k)
    # bf16 MXU operands + approx reciprocal -> looser tolerance than a pure-f32 run
    assert jnp.allclose(out, ref, atol=2e-2, rtol=2e-2), "mismatch vs reference"

    print("KERNEL_OK")
</pallas_src>

<mosaic_0001>
module attributes {stable_mosaic.version = 11 : i64} {
  func.func @tblock_kernel(%arg0: i32, %arg1: memref<8x32xf32, #tpu.memory_space<vmem>>, %arg2: memref<32x384xbf16, #tpu.memory_space<vmem>>, %arg3: memref<1x384xf32, #tpu.memory_space<vmem>>, %arg4: memref<128x32xbf16, #tpu.memory_space<vmem>>, %arg5: memref<1x32xf32, #tpu.memory_space<vmem>>, %arg6: memref<1x32xf32, #tpu.memory_space<vmem>>, %arg7: memref<1x32xf32, #tpu.memory_space<vmem>>, %arg8: memref<32x128xbf16, #tpu.memory_space<vmem>>, %arg9: memref<1x128xf32, #tpu.memory_space<vmem>>, %arg10: memref<128x32xbf16, #tpu.memory_space<vmem>>, %arg11: memref<1x32xf32, #tpu.memory_space<vmem>>, %arg12: memref<1x32xf32, #tpu.memory_space<vmem>>, %arg13: memref<1x32xf32, #tpu.memory_space<vmem>>, %arg14: memref<8x32xf32, #tpu.memory_space<vmem>>) attributes {dimension_semantics = [#tpu.dimension_semantics<parallel>], iteration_bounds = array<i64: 2>, scalar_prefetch = 0 : i64, scratch_operands = 0 : i64, tpu.core_type = #tpu.core_type<tc>, window_params = [{transform_indices = @transform_0, window_bounds = array<i64: 8, 32>}, {pipeline_mode = #tpu.pipeline_mode<synchronous>, transform_indices = @transform_1, window_bounds = array<i64: 32, 384>}, {pipeline_mode = #tpu.pipeline_mode<synchronous>, transform_indices = @transform_2, window_bounds = array<i64: 1, 384>}, {pipeline_mode = #tpu.pipeline_mode<synchronous>, transform_indices = @transform_3, window_bounds = array<i64: 128, 32>}, {pipeline_mode = #tpu.pipeline_mode<synchronous>, transform_indices = @transform_4, window_bounds = array<i64: 1, 32>}, {pipeline_mode = #tpu.pipeline_mode<synchronous>, transform_indices = @transform_5, window_bounds = array<i64: 1, 32>}, {pipeline_mode = #tpu.pipeline_mode<synchronous>, transform_indices = @transform_6, window_bounds = array<i64: 1, 32>}, {pipeline_mode = #tpu.pipeline_mode<synchronous>, transform_indices = @transform_7, window_bounds = array<i64: 32, 128>}, {pipeline_mode = #tpu.pipeline_mode<synchronous>, transform_indices = @transform_8, window_bounds = array<i64: 1, 128>}, {pipeline_mode = #tpu.pipeline_mode<synchronous>, transform_indices = @transform_9, window_bounds = array<i64: 128, 32>}, {pipeline_mode = #tpu.pipeline_mode<synchronous>, transform_indices = @transform_10, window_bounds = array<i64: 1, 32>}, {pipeline_mode = #tpu.pipeline_mode<synchronous>, transform_indices = @transform_11, window_bounds = array<i64: 1, 32>}, {pipeline_mode = #tpu.pipeline_mode<synchronous>, transform_indices = @transform_12, window_bounds = array<i64: 1, 32>}, {transform_indices = @transform_13, window_bounds = array<i64: 8, 32>}]} {
    %c0 = arith.constant 0 : index
    %c0_0 = arith.constant 0 : index
    %0 = vector.load %arg1[%c0, %c0_0] : memref<8x32xf32, #tpu.memory_space<vmem>>, vector<8x32xf32>
    %1 = arith.truncf %0 : vector<8x32xf32> to vector<8x32xbf16>
    %c0_1 = arith.constant 0 : index
    %c0_2 = arith.constant 0 : index
    %2 = vector.load %arg2[%c0_1, %c0_2] : memref<32x384xbf16, #tpu.memory_space<vmem>>, vector<32x384xbf16>
    %cst = arith.constant dense<0.000000e+00> : vector<8x384xf32>
    %3 = tpu.matmul %1, %2, %cst {dimension_numbers = #tpu.dot_dimension_numbers<[1], [0], [0], [1], [0, 0, 1, 1], [], []>} : vector<8x32xbf16>, vector<32x384xbf16>, vector<8x384xf32> -> vector<8x384xf32>
    %c0_3 = arith.constant 0 : index
    %c0_4 = arith.constant 0 : index
    %4 = vector.load %arg3[%c0_3, %c0_4] : memref<1x384xf32, #tpu.memory_space<vmem>>, vector<1x384xf32>
    %5 = vector.broadcast %4 : vector<1x384xf32> to vector<8x384xf32>
    %6 = arith.addf %3, %5 : vector<8x384xf32>
    %7 = arith.truncf %6 : vector<8x384xf32> to vector<8x384xbf16>
    %8 = vector.extract_strided_slice %7 {offsets = [0, 0], sizes = [8, 32], strides = [1, 1]} : vector<8x384xbf16> to vector<8x32xbf16>
    %9 = vector.extract_strided_slice %7 {offsets = [0, 32], sizes = [8, 32], strides = [1, 1]} : vector<8x384xbf16> to vector<8x32xbf16>
    %10 = vector.extract_strided_slice %7 {offsets = [0, 64], sizes = [8, 32], strides = [1, 1]} : vector<8x384xbf16> to vector<8x32xbf16>
    %11 = vector.extract_strided_slice %7 {offsets = [0, 96], sizes = [8, 32], strides = [1, 1]} : vector<8x384xbf16> to vector<8x32xbf16>
    %12 = vector.shape_cast %8 : vector<8x32xbf16> to vector<1x8x32xbf16>
    %13 = vector.shape_cast %9 : vector<8x32xbf16> to vector<1x8x32xbf16>
    %14 = vector.shape_cast %10 : vector<8x32xbf16> to vector<1x8x32xbf16>
    %15 = vector.shape_cast %11 : vector<8x32xbf16> to vector<1x8x32xbf16>
    %16 = tpu.concatenate %12, %13, %14, %15 in 0 : vector<1x8x32xbf16>, vector<1x8x32xbf16>, vector<1x8x32xbf16>, vector<1x8x32xbf16> -> vector<4x8x32xbf16>
    %17 = vector.extract_strided_slice %7 {offsets = [0, 128], sizes = [8, 32], strides = [1, 1]} : vector<8x384xbf16> to vector<8x32xbf16>
    %18 = vector.extract_strided_slice %7 {offsets = [0, 160], sizes = [8, 32], strides = [1, 1]} : vector<8x384xbf16> to vector<8x32xbf16>
    %19 = vector.extract_strided_slice %7 {offsets = [0, 192], sizes = [8, 32], strides = [1, 1]} : vector<8x384xbf16> to vector<8x32xbf16>
    %20 = vector.extract_strided_slice %7 {offsets = [0, 224], sizes = [8, 32], strides = [1, 1]} : vector<8x384xbf16> to vector<8x32xbf16>
    %21 = vector.shape_cast %17 : vector<8x32xbf16> to vector<1x8x32xbf16>
    %22 = vector.shape_cast %18 : vector<8x32xbf16> to vector<1x8x32xbf16>
    %23 = vector.shape_cast %19 : vector<8x32xbf16> to vector<1x8x32xbf16>
    %24 = vector.shape_cast %20 : vector<8x32xbf16> to vector<1x8x32xbf16>
    %25 = tpu.concatenate %21, %22, %23, %24 in 0 : vector<1x8x32xbf16>, vector<1x8x32xbf16>, vector<1x8x32xbf16>, vector<1x8x32xbf16> -> vector<4x8x32xbf16>
    %26 = vector.extract_strided_slice %7 {offsets = [0, 256], sizes = [8, 32], strides = [1, 1]} : vector<8x384xbf16> to vector<8x32xbf16>
    %27 = vector.extract_strided_slice %7 {offsets = [0, 288], sizes = [8, 32], strides = [1, 1]} : vector<8x384xbf16> to vector<8x32xbf16>
    %28 = vector.extract_strided_slice %7 {offsets = [0, 320], sizes = [8, 32], strides = [1, 1]} : vector<8x384xbf16> to vector<8x32xbf16>
    %29 = vector.extract_strided_slice %7 {offsets = [0, 352], sizes = [8, 32], strides = [1, 1]} : vector<8x384xbf16> to vector<8x32xbf16>
    %30 = vector.shape_cast %26 : vector<8x32xbf16> to vector<1x8x32xbf16>
    %31 = vector.shape_cast %27 : vector<8x32xbf16> to vector<1x8x32xbf16>
    %32 = vector.shape_cast %28 : vector<8x32xbf16> to vector<1x8x32xbf16>
    %33 = vector.shape_cast %29 : vector<8x32xbf16> to vector<1x8x32xbf16>
    %34 = tpu.concatenate %30, %31, %32, %33 in 0 : vector<1x8x32xbf16>, vector<1x8x32xbf16>, vector<1x8x32xbf16>, vector<1x8x32xbf16> -> vector<4x8x32xbf16>
    "tpu.trace_start"() <{level = 10 : i32, message = "gik,gjk->gij"}> : () -> ()
    %cst_5 = arith.constant dense<0.000000e+00> : vector<4x8x8xf32>
    %35 = tpu.matmul %25, %16, %cst_5 {dimension_numbers = #tpu.dot_dimension_numbers<[2], [2], [1], [1], [0, 0, 0, 1, 1, 1], [0], [0]>} : vector<4x8x32xbf16>, vector<4x8x32xbf16>, vector<4x8x8xf32> -> vector<4x8x8xf32>
    "tpu.trace_stop"() : () -> ()
    %cst_6 = arith.constant dense<0xFF800000> : vector<4x8xf32>
    %36 = vector.multi_reduction <maximumf>, %35, %cst_6 [2] : vector<4x8x8xf32> to vector<4x8xf32>
    %37 = vector.shape_cast %36 : vector<4x8xf32> to vector<4x8x1xf32>
    %38 = vector.broadcast %37 : vector<4x8x1xf32> to vector<4x8x8xf32>
    %39 = arith.subf %35, %38 : vector<4x8x8xf32>
    %40 = math.exp %39 : vector<4x8x8xf32>
    %cst_7 = arith.constant dense<0.000000e+00> : vector<4x8xf32>
    %41 = vector.multi_reduction <add>, %40, %cst_7 [2] : vector<4x8x8xf32> to vector<4x8xf32>
    %42 = vector.shape_cast %41 : vector<4x8xf32> to vector<4x8x1xf32>
    %43 = arith.truncf %40 : vector<4x8x8xf32> to vector<4x8x8xbf16>
    "tpu.trace_start"() <{level = 10 : i32, message = "gij,gjd->gid"}> : () -> ()
    %cst_8 = arith.constant dense<0.000000e+00> : vector<4x8x32xf32>
    %44 = tpu.matmul %43, %34, %cst_8 {dimension_numbers = #tpu.dot_dimension_numbers<[2], [1], [1], [2], [0, 0, 0, 1, 1, 2], [0], [0]>} : vector<4x8x8xbf16>, vector<4x8x32xbf16>, vector<4x8x32xf32> -> vector<4x8x32xf32>
    "tpu.trace_stop"() : () -> ()
    %45 = tpu.reciprocal %42 {approx = true} : vector<4x8x1xf32> -> vector<4x8x1xf32>
    %46 = vector.broadcast %45 : vector<4x8x1xf32> to vector<4x8x32xf32>
    %47 = arith.mulf %44, %46 : vector<4x8x32xf32>
    %48 = vector.extract_strided_slice %47 {offsets = [0, 0, 0], sizes = [1, 8, 32], strides = [1, 1, 1]} : vector<4x8x32xf32> to vector<1x8x32xf32>
    %49 = vector.shape_cast %48 : vector<1x8x32xf32> to vector<8x32xf32>
    %50 = vector.extract_strided_slice %47 {offsets = [1, 0, 0], sizes = [1, 8, 32], strides = [1, 1, 1]} : vector<4x8x32xf32> to vector<1x8x32xf32>
    %51 = vector.shape_cast %50 : vector<1x8x32xf32> to vector<8x32xf32>
    %52 = vector.extract_strided_slice %47 {offsets = [2, 0, 0], sizes = [1, 8, 32], strides = [1, 1, 1]} : vector<4x8x32xf32> to vector<1x8x32xf32>
    %53 = vector.shape_cast %52 : vector<1x8x32xf32> to vector<8x32xf32>
    %54 = vector.extract_strided_slice %47 {offsets = [3, 0, 0], sizes = [1, 8, 32], strides = [1, 1, 1]} : vector<4x8x32xf32> to vector<1x8x32xf32>
    %55 = vector.shape_cast %54 : vector<1x8x32xf32> to vector<8x32xf32>
    %56 = tpu.concatenate %49, %51, %53, %55 in 1 : vector<8x32xf32>, vector<8x32xf32>, vector<8x32xf32>, vector<8x32xf32> -> vector<8x128xf32>
    %57 = arith.truncf %56 : vector<8x128xf32> to vector<8x128xbf16>
    %c0_9 = arith.constant 0 : index
    %c0_10 = arith.constant 0 : index
    %58 = vector.load %arg4[%c0_9, %c0_10] : memref<128x32xbf16, #tpu.memory_space<vmem>>, vector<128x32xbf16>
    %cst_11 = arith.constant dense<0.000000e+00> : vector<8x32xf32>
    %59 = tpu.matmul %57, %58, %cst_11 {dimension_numbers = #tpu.dot_dimension_numbers<[1], [0], [0], [1], [0, 0, 1, 1], [], []>} : vector<8x128xbf16>, vector<128x32xbf16>, vector<8x32xf32> -> vector<8x32xf32>
    %c0_12 = arith.constant 0 : index
    %c0_13 = arith.constant 0 : index
    %60 = vector.load %arg5[%c0_12, %c0_13] : memref<1x32xf32, #tpu.memory_space<vmem>>, vector<1x32xf32>
    %61 = vector.broadcast %60 : vector<1x32xf32> to vector<8x32xf32>
    %62 = arith.addf %59, %61 : vector<8x32xf32>
    %63 = arith.addf %62, %0 : vector<8x32xf32>
    %c0_14 = arith.constant 0 : index
    %c0_15 = arith.constant 0 : index
    %64 = vector.load %arg6[%c0_14, %c0_15] : memref<1x32xf32, #tpu.memory_space<vmem>>, vector<1x32xf32>
    %c0_16 = arith.constant 0 : index
    %c0_17 = arith.constant 0 : index
    %65 = vector.load %arg7[%c0_16, %c0_17] : memref<1x32xf32, #tpu.memory_space<vmem>>, vector<1x32xf32>
    %cst_18 = arith.constant dense<0.000000e+00> : vector<8xf32>
    %66 = vector.multi_reduction <add>, %63, %cst_18 [1] : vector<8x32xf32> to vector<8xf32>
    %67 = vector.shape_cast %66 : vector<8xf32> to vector<8x1xf32>
    %cst_19 = arith.constant 3.200000e+01 : f32
    %68 = vector.broadcast %cst_19 : f32 to vector<8x1xf32>
    %69 = arith.divf %67, %68 : vector<8x1xf32>
    %70 = vector.broadcast %69 : vector<8x1xf32> to vector<8x32xf32>
    %71 = arith.subf %63, %70 : vector<8x32xf32>
    %72 = arith.mulf %71, %71 : vector<8x32xf32>
    %cst_20 = arith.constant dense<0.000000e+00> : vector<8xf32>
    %73 = vector.multi_reduction <add>, %72, %cst_20 [1] : vector<8x32xf32> to vector<8xf32>
    %74 = vector.shape_cast %73 : vector<8xf32> to vector<8x1xf32>
    %cst_21 = arith.constant 3.200000e+01 : f32
    %75 = vector.broadcast %cst_21 : f32 to vector<8x1xf32>
    %76 = arith.divf %74, %75 : vector<8x1xf32>
    %77 = vector.broadcast %69 : vector<8x1xf32> to vector<8x32xf32>
    %78 = arith.subf %63, %77 : vector<8x32xf32>
    %cst_22 = arith.constant 9.99999974E-6 : f32
    %79 = vector.broadcast %cst_22 : f32 to vector<8x1xf32>
    %80 = arith.addf %76, %79 : vector<8x1xf32>
    %81 = math.rsqrt %80 : vector<8x1xf32>
    %82 = vector.broadcast %81 : vector<8x1xf32> to vector<8x32xf32>
    %83 = arith.mulf %78, %82 : vector<8x32xf32>
    %84 = vector.broadcast %64 : vector<1x32xf32> to vector<8x32xf32>
    %85 = arith.mulf %83, %84 : vector<8x32xf32>
    %86 = vector.broadcast %65 : vector<1x32xf32> to vector<8x32xf32>
    %87 = arith.addf %85, %86 : vector<8x32xf32>
    %88 = arith.truncf %87 : vector<8x32xf32> to vector<8x32xbf16>
    %c0_23 = arith.constant 0 : index
    %c0_24 = arith.constant 0 : index
    %89 = vector.load %arg8[%c0_23, %c0_24] : memref<32x128xbf16, #tpu.memory_space<vmem>>, vector<32x128xbf16>
    %cst_25 = arith.constant dense<0.000000e+00> : vector<8x128xf32>
    %90 = tpu.matmul %88, %89, %cst_25 {dimension_numbers = #tpu.dot_dimension_numbers<[1], [0], [0], [1], [0, 0, 1, 1], [], []>} : vector<8x32xbf16>, vector<32x128xbf16>, vector<8x128xf32> -> vector<8x128xf32>
    %c0_26 = arith.constant 0 : index
    %c0_27 = arith.constant 0 : index
    %91 = vector.load %arg9[%c0_26, %c0_27] : memref<1x128xf32, #tpu.memory_space<vmem>>, vector<1x128xf32>
    %92 = vector.broadcast %91 : vector<1x128xf32> to vector<8x128xf32>
    %93 = arith.addf %90, %92 : vector<8x128xf32>
    %cst_28 = arith.constant 0.000000e+00 : f32
    %94 = vector.broadcast %cst_28 : f32 to vector<8x128xf32>
    %95 = arith.maximumf %93, %94 : vector<8x128xf32>
    %96 = arith.truncf %95 : vector<8x128xf32> to vector<8x128xbf16>
    %c0_29 = arith.constant 0 : index
    %c0_30 = arith.constant 0 : index
    %97 = vector.load %arg10[%c0_29, %c0_30] : memref<128x32xbf16, #tpu.memory_space<vmem>>, vector<128x32xbf16>
    %cst_31 = arith.constant dense<0.000000e+00> : vector<8x32xf32>
    %98 = tpu.matmul %96, %97, %cst_31 {dimension_numbers = #tpu.dot_dimension_numbers<[1], [0], [0], [1], [0, 0, 1, 1], [], []>} : vector<8x128xbf16>, vector<128x32xbf16>, vector<8x32xf32> -> vector<8x32xf32>
    %c0_32 = arith.constant 0 : index
    %c0_33 = arith.constant 0 : index
    %99 = vector.load %arg11[%c0_32, %c0_33] : memref<1x32xf32, #tpu.memory_space<vmem>>, vector<1x32xf32>
    %100 = vector.broadcast %99 : vector<1x32xf32> to vector<8x32xf32>
    %101 = arith.addf %98, %100 : vector<8x32xf32>
    %102 = arith.addf %101, %87 : vector<8x32xf32>
    %c0_34 = arith.constant 0 : index
    %c0_35 = arith.constant 0 : index
    %103 = vector.load %arg12[%c0_34, %c0_35] : memref<1x32xf32, #tpu.memory_space<vmem>>, vector<1x32xf32>
    %c0_36 = arith.constant 0 : index
    %c0_37 = arith.constant 0 : index
    %104 = vector.load %arg13[%c0_36, %c0_37] : memref<1x32xf32, #tpu.memory_space<vmem>>, vector<1x32xf32>
    %cst_38 = arith.constant dense<0.000000e+00> : vector<8xf32>
    %105 = vector.multi_reduction <add>, %102, %cst_38 [1] : vector<8x32xf32> to vector<8xf32>
    %106 = vector.shape_cast %105 : vector<8xf32> to vector<8x1xf32>
    %cst_39 = arith.constant 3.200000e+01 : f32
    %107 = vector.broadcast %cst_39 : f32 to vector<8x1xf32>
    %108 = arith.divf %106, %107 : vector<8x1xf32>
    %109 = vector.broadcast %108 : vector<8x1xf32> to vector<8x32xf32>
    %110 = arith.subf %102, %109 : vector<8x32xf32>
    %111 = arith.mulf %110, %110 : vector<8x32xf32>
    %cst_40 = arith.constant dense<0.000000e+00> : vector<8xf32>
    %112 = vector.multi_reduction <add>, %111, %cst_40 [1] : vector<8x32xf32> to vector<8xf32>
    %113 = vector.shape_cast %112 : vector<8xf32> to vector<8x1xf32>
    %cst_41 = arith.constant 3.200000e+01 : f32
    %114 = vector.broadcast %cst_41 : f32 to vector<8x1xf32>
    %115 = arith.divf %113, %114 : vector<8x1xf32>
    %116 = vector.broadcast %108 : vector<8x1xf32> to vector<8x32xf32>
    %117 = arith.subf %102, %116 : vector<8x32xf32>
    %cst_42 = arith.constant 9.99999974E-6 : f32
    %118 = vector.broadcast %cst_42 : f32 to vector<8x1xf32>
    %119 = arith.addf %115, %118 : vector<8x1xf32>
    %120 = math.rsqrt %119 : vector<8x1xf32>
    %121 = vector.broadcast %120 : vector<8x1xf32> to vector<8x32xf32>
    %122 = arith.mulf %117, %121 : vector<8x32xf32>
    %123 = vector.broadcast %103 : vector<1x32xf32> to vector<8x32xf32>
    %124 = arith.mulf %122, %123 : vector<8x32xf32>
    %125 = vector.broadcast %104 : vector<1x32xf32> to vector<8x32xf32>
    %126 = arith.addf %124, %125 : vector<8x32xf32>
    %c0_43 = arith.constant 0 : index
    %c0_44 = arith.constant 0 : index
    %127 = vector.load %arg14[%c0_43, %c0_44] : memref<8x32xf32, #tpu.memory_space<vmem>>, vector<8x32xf32>
    tpu.vector_store %arg14[%c0_43, %c0_44], %126 {strides = array<i32>} : memref<8x32xf32, #tpu.memory_space<vmem>>, vector<8x32xf32>,
    return
  }
  func.func @transform_0(%arg0: i32) -> (i32, i32) {
    %c0_i32 = arith.constant 0 : i32
    %c0_i32_0 = arith.constant 0 : i32
    return %arg0, %c0_i32 : i32, i32
  }
  func.func @transform_1(%arg0: i32) -> (i32, i32) {
    %c0_i32 = arith.constant 0 : i32
    %c0_i32_0 = arith.constant 0 : i32
    %c0_i32_1 = arith.constant 0 : i32
    return %c0_i32, %c0_i32_0 : i32, i32
  }
  func.func @transform_2(%arg0: i32) -> (i32, i32) {
    %c0_i32 = arith.constant 0 : i32
    %c0_i32_0 = arith.constant 0 : i32
    %c0_i32_1 = arith.constant 0 : i32
    return %c0_i32, %c0_i32_0 : i32, i32
  }
  func.func @transform_3(%arg0: i32) -> (i32, i32) {
    %c0_i32 = arith.constant 0 : i32
    %c0_i32_0 = arith.constant 0 : i32
    %c0_i32_1 = arith.constant 0 : i32
    return %c0_i32, %c0_i32_0 : i32, i32
  }
  func.func @transform_4(%arg0: i32) -> (i32, i32) {
    %c0_i32 = arith.constant 0 : i32
    %c0_i32_0 = arith.constant 0 : i32
    %c0_i32_1 = arith.constant 0 : i32
    return %c0_i32, %c0_i32_0 : i32, i32
  }
  func.func @transform_5(%arg0: i32) -> (i32, i32) {
    %c0_i32 = arith.constant 0 : i32
    %c0_i32_0 = arith.constant 0 : i32
    %c0_i32_1 = arith.constant 0 : i32
    return %c0_i32, %c0_i32_0 : i32, i32
  }
  func.func @transform_6(%arg0: i32) -> (i32, i32) {
    %c0_i32 = arith.constant 0 : i32
    %c0_i32_0 = arith.constant 0 : i32
    %c0_i32_1 = arith.constant 0 : i32
    return %c0_i32, %c0_i32_0 : i32, i32
  }
  func.func @transform_7(%arg0: i32) -> (i32, i32) {
    %c0_i32 = arith.constant 0 : i32
    %c0_i32_0 = arith.constant 0 : i32
    %c0_i32_1 = arith.constant 0 : i32
    return %c0_i32, %c0_i32_0 : i32, i32
  }
  func.func @transform_8(%arg0: i32) -> (i32, i32) {
    %c0_i32 = arith.constant 0 : i32
    %c0_i32_0 = arith.constant 0 : i32
    %c0_i32_1 = arith.constant 0 : i32
    return %c0_i32, %c0_i32_0 : i32, i32
  }
  func.func @transform_9(%arg0: i32) -> (i32, i32) {
    %c0_i32 = arith.constant 0 : i32
    %c0_i32_0 = arith.constant 0 : i32
    %c0_i32_1 = arith.constant 0 : i32
    return %c0_i32, %c0_i32_0 : i32, i32
  }
  func.func @transform_10(%arg0: i32) -> (i32, i32) {
    %c0_i32 = arith.constant 0 : i32
    %c0_i32_0 = arith.constant 0 : i32
    %c0_i32_1 = arith.constant 0 : i32
    return %c0_i32, %c0_i32_0 : i32, i32
  }
  func.func @transform_11(%arg0: i32) -> (i32, i32) {
    %c0_i32 = arith.constant 0 : i32
    %c0_i32_0 = arith.constant 0 : i32
    %c0_i32_1 = arith.constant 0 : i32
    return %c0_i32, %c0_i32_0 : i32, i32
  }
  func.func @transform_12(%arg0: i32) -> (i32, i32) {
    %c0_i32 = arith.constant 0 : i32
    %c0_i32_0 = arith.constant 0 : i32
    %c0_i32_1 = arith.constant 0 : i32
    return %c0_i32, %c0_i32_0 : i32, i32
  }
  func.func @transform_13(%arg0: i32) -> (i32, i32) {
    %c0_i32 = arith.constant 0 : i32
    %c0_i32_0 = arith.constant 0 : i32
    return %arg0, %c0_i32 : i32, i32
  }
}

</mosaic_0001>

<llo_original>
// kernel: tpu_custom_call.1
$region0: #{tpu_custom_call.1}
  #allocation0 [shape = 'u32[]', space=smem, size = 0x4, offset = 0x4, fixed_abs, tag = 'smem constant byte address 0x4 - core index']
  #allocation1 [shape = 'u32[144,128]{1,0:T(1,128)}', space=vmem, size = 0x12000, scoped, tag = 'internal scratch']
  %s0 = inlined_call_operand.vmem [shape: f32[16,32], index: 0, kind: input, shape index: {}]
  %s1 = inlined_call_operand.vmem [shape: bf16[32,384], index: 1, kind: input, shape index: {}]
  %s2 = inlined_call_operand.vmem [shape: f32[1,384], index: 2, kind: input, shape index: {}]
  %s3 = inlined_call_operand.vmem [shape: bf16[128,32], index: 3, kind: input, shape index: {}]
  %s4 = inlined_call_operand.vmem [shape: f32[1,32], index: 4, kind: input, shape index: {}]
  %s5 = inlined_call_operand.vmem [shape: f32[1,32], index: 5, kind: input, shape index: {}]
  %s6 = inlined_call_operand.vmem [shape: f32[1,32], index: 6, kind: input, shape index: {}]
  %s7 = inlined_call_operand.vmem [shape: bf16[32,128], index: 7, kind: input, shape index: {}]
  %s8 = inlined_call_operand.vmem [shape: f32[1,128], index: 8, kind: input, shape index: {}]
  %s9 = inlined_call_operand.vmem [shape: bf16[128,32], index: 9, kind: input, shape index: {}]
  %s10 = inlined_call_operand.vmem [shape: f32[1,32], index: 10, kind: input, shape index: {}]
  %s11 = inlined_call_operand.vmem [shape: f32[1,32], index: 11, kind: input, shape index: {}]
  %s12 = inlined_call_operand.vmem [shape: f32[1,32], index: 12, kind: input, shape index: {}]
  %s13 = inlined_call_operand.hbm [shape: f32[16,32], index: 13, kind: output, shape index: {}]
  %s14 = sld [smem:[#allocation0]]
  $region85: #{tpu_custom_call.1} parent=0
    _
  %s16 = ssub.s32 1, %s14
  %s17 = scalar_select 0, %s16, %s14
  $region1: #{tpu_custom_call.1} parent=0
    #allocation2 [shape = 'u8[8192]{0}', space=vmem, size = 0x2000, scoped, tag = 'output window, operand 0']
    #allocation3 [shape = 's32[2]{0}', space=sflag, size = 0x8, scoped, tag = 'scoped memory for tpu_custom_call.1']
    %18 = vsyncpa [#allocation3], 0
    %s19 = scalar_lea.sflag [#allocation3], 1
    %20 = vsyncpa %s19, 0
    loop: start=0, step=1, limit=4
    $region2: #{tpu_custom_call.1} parent=1 // loop_pre_header
      _
    $region3: #{tpu_custom_call.1} parent=1 // loop_header
      %s22 = sphi 0, %s26
      %p23 = scmp.ge.s32.totalorder %s22, 4
      %s32 = sphi 0, %s34
      %s35 = sphi 0, %s32
      %s36 = sphi 0, %s35
      %s52 = sphi 0, %s36
      %s56 = sphi 0, %s56
      %s58 = sphi 0, %s56
      %s59 = sphi 0, %s58
      %s73 = sphi 0, %s59
      %s77 = sphi 0, %s77
      %s79 = sphi 0, %s77
      %s80 = sphi 0, %s79
      %s94 = sphi 0, %s80
      %s98 = sphi 0, %s98
      %s100 = sphi 0, %s98
      %s101 = sphi 0, %s100
      %s115 = sphi 0, %s101
      %s119 = sphi 0, %s119
      %s121 = sphi 0, %s119
      %s122 = sphi 0, %s121
      %s136 = sphi 0, %s122
      %s140 = sphi 0, %s140
      %s142 = sphi 0, %s140
      %s143 = sphi 0, %s142
      %s157 = sphi 0, %s143
      %s161 = sphi 0, %s161
      %s163 = sphi 0, %s161
      %s164 = sphi 0, %s163
      %s178 = sphi 0, %s164
      %s182 = sphi 0, %s182
      %s184 = sphi 0, %s182
      %s185 = sphi 0, %s184
      %s199 = sphi 0, %s185
      %s203 = sphi 0, %s203
      %s205 = sphi 0, %s203
      %s206 = sphi 0, %s205
      %s220 = sphi 0, %s206
      %s224 = sphi 0, %s224
      %s226 = sphi 0, %s224
      %s227 = sphi 0, %s226
      %s241 = sphi 0, %s227
      %s245 = sphi 0, %s245
      %s247 = sphi 0, %s245
      %s248 = sphi 0, %s247
      %s262 = sphi 0, %s248
      %s266 = sphi 0, %s266
      %s268 = sphi 0, %s266
      %s269 = sphi 0, %s268
      %s283 = sphi 0, %s269
      %s287 = sphi 0, %s287
      %s289 = sphi 0, %s287
      %s290 = sphi 0, %s289
      %s304 = sphi 0, %s290
      %s310 = sphi 0, %s312
      %s313 = sphi 0, %s310
      %s314 = sphi 0, %s313
      %s330 = sphi 0, %s314
    $region4: #{tpu_custom_call.1} parent=1 // loop_header_branch
      %25 = sbr.rel (%p23) target = $region8
    $region5: #{tpu_custom_call.1} parent=1 // loop_body
      %s27 = ssub.s32 %s22, 1
      %s28 = ssub.s32 %s22, 2
      %s29 = sadd.s32 %s22, 1
      %s30 = ssub.s32 %s22, %s29
      %p31 = scmp.eq.s32.totalorder %s30, 0
      %s33 = sadd.s32 %s32, 1
      %s34 = scalar_select %p31, %s32, %s33
      %p37 = pneg %p31
      %p38 = scmp.eq.s32.totalorder %s22, 1
      %p39 = por %p37, %p38
      %p40 = scmp.ne.s32.totalorder %s32, %s35
      %p41 = scmp.eq.s32.totalorder %s22, 0
      %p42 = por %p40, %p41
      %p43 = scmp.ne.s32.totalorder %s32, %s35
      %p44 = scmp.eq.s32.totalorder %s27, 1
      %p45 = por %p43, %p44
      %p46 = scmp.ne.s32.totalorder %s35, %s36
      %p47 = scmp.eq.s32.totalorder %s27, 0
      %p48 = por %p46, %p47
      %p49 = scmp.ne.s32.totalorder %s35, %s36
      %p50 = scmp.eq.s32.totalorder %s28, 1
      %p51 = por %p49, %p50
      %p53 = scmp.ne.s32.totalorder %s36, %s52
      %p54 = scmp.eq.s32.totalorder %s28, 0
      %p55 = por %p53, %p54
      %s57 = sadd.s32 %s56, 1
      %p60 = scmp.eq.s32.totalorder %s22, 1
      %p61 = scmp.ne.s32.totalorder %s56, %s58
      %p62 = scmp.eq.s32.totalorder %s22, 0
      %p63 = por %p61, %p62
      %p64 = scmp.ne.s32.totalorder %s56, %s58
      %p65 = scmp.eq.s32.totalorder %s27, 1
      %p66 = por %p64, %p65
      %p67 = scmp.ne.s32.totalorder %s58, %s59
      %p68 = scmp.eq.s32.totalorder %s27, 0
      %p69 = por %p67, %p68
      %p70 = scmp.ne.s32.totalorder %s58, %s59
      %p71 = scmp.eq.s32.totalorder %s28, 1
      %p72 = por %p70, %p71
      %p74 = scmp.ne.s32.totalorder %s59, %s73
      %p75 = scmp.eq.s32.totalorder %s28, 0
      %p76 = por %p74, %p75
      %s78 = sadd.s32 %s77, 1
      %p81 = scmp.eq.s32.totalorder %s22, 1
      %p82 = scmp.ne.s32.totalorder %s77, %s79
      %p83 = scmp.eq.s32.totalorder %s22, 0
      %p84 = por %p82, %p83
      %p85 = scmp.ne.s32.totalorder %s77, %s79
      %p86 = scmp.eq.s32.totalorder %s27, 1
      %p87 = por %p85, %p86
      %p88 = scmp.ne.s32.totalorder %s79, %s80
      %p89 = scmp.eq.s32.totalorder %s27, 0
      %p90 = por %p88, %p89
      %p91 = scmp.ne.s32.totalorder %s79, %s80
      %p92 = scmp.eq.s32.totalorder %s28, 1
      %p93 = por %p91, %p92
      %p95 = scmp.ne.s32.totalorder %s80, %s94
      %p96 = scmp.eq.s32.totalorder %s28, 0
      %p97 = por %p95, %p96
      %s99 = sadd.s32 %s98, 1
      %p102 = scmp.eq.s32.totalorder %s22, 1
      %p103 = scmp.ne.s32.totalorder %s98, %s100
      %p104 = scmp.eq.s32.totalorder %s22, 0
      %p105 = por %p103, %p104
      %p106 = scmp.ne.s32.totalorder %s98, %s100
      %p107 = scmp.eq.s32.totalorder %s27, 1
      %p108 = por %p106, %p107
      %p109 = scmp.ne.s32.totalorder %s100, %s101
      %p110 = scmp.eq.s32.totalorder %s27, 0
      %p111 = por %p109, %p110
      %p112 = scmp.ne.s32.totalorder %s100, %s101
      %p113 = scmp.eq.s32.totalorder %s28, 1
      %p114 = por %p112, %p113
      %p116 = scmp.ne.s32.totalorder %s101, %s115
      %p117 = scmp.eq.s32.totalorder %s28, 0
      %p118 = por %p116, %p117
      %s120 = sadd.s32 %s119, 1
      %p123 = scmp.eq.s32.totalorder %s22, 1
      %p124 = scmp.ne.s32.totalorder %s119, %s121
      %p125 = scmp.eq.s32.totalorder %s22, 0
      %p126 = por %p124, %p125
      %p127 = scmp.ne.s32.totalorder %s119, %s121
      %p128 = scmp.eq.s32.totalorder %s27, 1
      %p129 = por %p127, %p128
      %p130 = scmp.ne.s32.totalorder %s121, %s122
      %p131 = scmp.eq.s32.totalorder %s27, 0
      %p132 = por %p130, %p131
      %p133 = scmp.ne.s32.totalorder %s121, %s122
      %p134 = scmp.eq.s32.totalorder %s28, 1
      %p135 = por %p133, %p134
      %p137 = scmp.ne.s32.totalorder %s122, %s136
      %p138 = scmp.eq.s32.totalorder %s28, 0
      %p139 = por %p137, %p138
      %s141 = sadd.s32 %s140, 1
      %p144 = scmp.eq.s32.totalorder %s22, 1
      %p145 = scmp.ne.s32.totalorder %s140, %s142
      %p146 = scmp.eq.s32.totalorder %s22, 0
      %p147 = por %p145, %p146
      %p148 = scmp.ne.s32.totalorder %s140, %s142
      %p149 = scmp.eq.s32.totalorder %s27, 1
      %p150 = por %p148, %p149
      %p151 = scmp.ne.s32.totalorder %s142, %s143
      %p152 = scmp.eq.s32.totalorder %s27, 0
      %p153 = por %p151, %p152
      %p154 = scmp.ne.s32.totalorder %s142, %s143
      %p155 = scmp.eq.s32.totalorder %s28, 1
      %p156 = por %p154, %p155
      %p158 = scmp.ne.s32.totalorder %s143, %s157
      %p159 = scmp.eq.s32.totalorder %s28, 0
      %p160 = por %p158, %p159
      %s162 = sadd.s32 %s161, 1
      %p165 = scmp.eq.s32.totalorder %s22, 1
      %p166 = scmp.ne.s32.totalorder %s161, %s163
      %p167 = scmp.eq.s32.totalorder %s22, 0
      %p168 = por %p166, %p167
      %p169 = scmp.ne.s32.totalorder %s161, %s163
      %p170 = scmp.eq.s32.totalorder %s27, 1
      %p171 = por %p169, %p170
      %p172 = scmp.ne.s32.totalorder %s163, %s164
      %p173 = scmp.eq.s32.totalorder %s27, 0
      %p174 = por %p172, %p173
      %p175 = scmp.ne.s32.totalorder %s163, %s164
      %p176 = scmp.eq.s32.totalorder %s28, 1
      %p177 = por %p175, %p176
      %p179 = scmp.ne.s32.totalorder %s164, %s178
      %p180 = scmp.eq.s32.totalorder %s28, 0
      %p181 = por %p179, %p180
      %s183 = sadd.s32 %s182, 1
      %p186 = scmp.eq.s32.totalorder %s22, 1
      %p187 = scmp.ne.s32.totalorder %s182, %s184
      %p188 = scmp.eq.s32.totalorder %s22, 0
      %p189 = por %p187, %p188
      %p190 = scmp.ne.s32.totalorder %s182, %s184
      %p191 = scmp.eq.s32.totalorder %s27, 1
      %p192 = por %p190, %p191
      %p193 = scmp.ne.s32.totalorder %s184, %s185
      %p194 = scmp.eq.s32.totalorder %s27, 0
      %p195 = por %p193, %p194
      %p196 = scmp.ne.s32.totalorder %s184, %s185
      %p197 = scmp.eq.s32.totalorder %s28, 1
      %p198 = por %p196, %p197
      %p200 = scmp.ne.s32.totalorder %s185, %s199
      %p201 = scmp.eq.s32.totalorder %s28, 0
      %p202 = por %p200, %p201
      %s204 = sadd.s32 %s203, 1
      %p207 = scmp.eq.s32.totalorder %s22, 1
      %p208 = scmp.ne.s32.totalorder %s203, %s205
      %p209 = scmp.eq.s32.totalorder %s22, 0
      %p210 = por %p208, %p209
      %p211 = scmp.ne.s32.totalorder %s203, %s205
      %p212 = scmp.eq.s32.totalorder %s27, 1
      %p213 = por %p211, %p212
      %p214 = scmp.ne.s32.totalorder %s205, %s206
      %p215 = scmp.eq.s32.totalorder %s27, 0
      %p216 = por %p214, %p215
      %p217 = scmp.ne.s32.totalorder %s205, %s206
      %p218 = scmp.eq.s32.totalorder %s28, 1
      %p219 = por %p217, %p218
      %p221 = scmp.ne.s32.totalorder %s206, %s220
      %p222 = scmp.eq.s32.totalorder %s28, 0
      %p223 = por %p221, %p222
      %s225 = sadd.s32 %s224, 1
      %p228 = scmp.eq.s32.totalorder %s22, 1
      %p229 = scmp.ne.s32.totalorder %s224, %s226
      %p230 = scmp.eq.s32.totalorder %s22, 0
      %p231 = por %p229, %p230
      %p232 = scmp.ne.s32.totalorder %s224, %s226
      %p233 = scmp.eq.s32.totalorder %s27, 1
      %p234 = por %p232, %p233
      %p235 = scmp.ne.s32.totalorder %s226, %s227
      %p236 = scmp.eq.s32.totalorder %s27, 0
      %p237 = por %p235, %p236
      %p238 = scmp.ne.s32.totalorder %s226, %s227
      %p239 = scmp.eq.s32.totalorder %s28, 1
      %p240 = por %p238, %p239
      %p242 = scmp.ne.s32.totalorder %s227, %s241
      %p243 = scmp.eq.s32.totalorder %s28, 0
      %p244 = por %p242, %p243
      %s246 = sadd.s32 %s245, 1
      %p249 = scmp.eq.s32.totalorder %s22, 1
      %p250 = scmp.ne.s32.totalorder %s245, %s247
      %p251 = scmp.eq.s32.totalorder %s22, 0
      %p252 = por %p250, %p251
      %p253 = scmp.ne.s32.totalorder %s245, %s247
      %p254 = scmp.eq.s32.totalorder %s27, 1
      %p255 = por %p253, %p254
      %p256 = scmp.ne.s32.totalorder %s247, %s248
      %p257 = scmp.eq.s32.totalorder %s27, 0
      %p258 = por %p256, %p257
      %p259 = scmp.ne.s32.totalorder %s247, %s248
      %p260 = scmp.eq.s32.totalorder %s28, 1
      %p261 = por %p259, %p260
      %p263 = scmp.ne.s32.totalorder %s248, %s262
      %p264 = scmp.eq.s32.totalorder %s28, 0
      %p265 = por %p263, %p264
      %s267 = sadd.s32 %s266, 1
      %p270 = scmp.eq.s32.totalorder %s22, 1
      %p271 = scmp.ne.s32.totalorder %s266, %s268
      %p272 = scmp.eq.s32.totalorder %s22, 0
      %p273 = por %p271, %p272
      %p274 = scmp.ne.s32.totalorder %s266, %s268
      %p275 = scmp.eq.s32.totalorder %s27, 1
      %p276 = por %p274, %p275
      %p277 = scmp.ne.s32.totalorder %s268, %s269
      %p278 = scmp.eq.s32.totalorder %s27, 0
      %p279 = por %p277, %p278
      %p280 = scmp.ne.s32.totalorder %s268, %s269
      %p281 = scmp.eq.s32.totalorder %s28, 1
      %p282 = por %p280, %p281
      %p284 = scmp.ne.s32.totalorder %s269, %s283
      %p285 = scmp.eq.s32.totalorder %s28, 0
      %p286 = por %p284, %p285
      %s288 = sadd.s32 %s287, 1
      %p291 = scmp.eq.s32.totalorder %s22, 1
      %p292 = scmp.ne.s32.totalorder %s287, %s289
      %p293 = scmp.eq.s32.totalorder %s22, 0
      %p294 = por %p292, %p293
      %p295 = scmp.ne.s32.totalorder %s287, %s289
      %p296 = scmp.eq.s32.totalorder %s27, 1
      %p297 = por %p295, %p296
      %p298 = scmp.ne.s32.totalorder %s289, %s290
      %p299 = scmp.eq.s32.totalorder %s27, 0
      %p300 = por %p298, %p299
      %p301 = scmp.ne.s32.totalorder %s289, %s290
      %p302 = scmp.eq.s32.totalorder %s28, 1
      %p303 = por %p301, %p302
      %p305 = scmp.ne.s32.totalorder %s290, %s304
      %p306 = scmp.eq.s32.totalorder %s28, 0
      %p307 = por %p305, %p306
      %s308 = ssub.s32 %s22, %s29
      %p309 = scmp.eq.s32.totalorder %s308, 0
      %s311 = sadd.s32 %s310, 1
      %s312 = scalar_select %p309, %s310, %s311
      %p315 = pneg %p309
      %p316 = scmp.eq.s32.totalorder %s22, 1
      %p317 = por %p315, %p316
      %p318 = scmp.ne.s32.totalorder %s310, %s313
      %p319 = scmp.eq.s32.totalorder %s22, 0
      %p320 = por %p318, %p319
      %p321 = scmp.ne.s32.totalorder %s310, %s313
      %p322 = scmp.eq.s32.totalorder %s27, 1
      %p323 = por %p321, %p322
      %p324 = scmp.ne.s32.totalorder %s313, %s314
      %p325 = scmp.eq.s32.totalorder %s27, 0
      %p326 = por %p324, %p325
      %p327 = scmp.ne.s32.totalorder %s313, %s314
      %p328 = scmp.eq.s32.totalorder %s28, 1
      %p329 = por %p327, %p328
      %p331 = scmp.ne.s32.totalorder %s314, %s330
      %p332 = scmp.eq.s32.totalorder %s28, 0
      %p333 = por %p331, %p332
      %p334 = scmp.le.s32.totalorder 1, %s22
      %p335 = scmp.lt.s32.totalorder %s22, 3
      %p336 = pnand %p334, %p335
      %p337 = pneg %p336
      // Predicated region
      $region9: #{tpu_custom_call.1} parent=5 // pred_check
        _
      $region10: #{tpu_custom_call.1} parent=5 // pred_check_branch
        %339 = sbr.rel (%p336) target = $region12
      $region11: #{tpu_custom_call.1} parent=5 // pred_region
        %s340 = ssub.s32 %s22, 1
        // Predicated region
        $region13: #{tpu_custom_call.1} parent=11 // pred_check
          %p341 = pneg %p69
        $region14: #{tpu_custom_call.1} parent=11 // pred_check_branch
          %343 = sbr.rel (%p341) target = $region16
        $region15: #{tpu_custom_call.1} parent=11 // pred_region
          _
        $region16: #{tpu_custom_call.1} parent=11 // pred_fallthru
          _
        // Predicated region
        $region17: #{tpu_custom_call.1} parent=11 // pred_check
          %p344 = pneg %p90
        $region18: #{tpu_custom_call.1} parent=11 // pred_check_branch
          %346 = sbr.rel (%p344) target = $region20
        $region19: #{tpu_custom_call.1} parent=11 // pred_region
          _
        $region20: #{tpu_custom_call.1} parent=11 // pred_fallthru
          _
        // Predicated region
        $region21: #{tpu_custom_call.1} parent=11 // pred_check
          %p347 = pneg %p111
        $region22: #{tpu_custom_call.1} parent=11 // pred_check_branch
          %349 = sbr.rel (%p347) target = $region24
        $region23: #{tpu_custom_call.1} parent=11 // pred_region
          _
        $region24: #{tpu_custom_call.1} parent=11 // pred_fallthru
          _
        // Predicated region
        $region25: #{tpu_custom_call.1} parent=11 // pred_check
          %p350 = pneg %p132
        $region26: #{tpu_custom_call.1} parent=11 // pred_check_branch
          %352 = sbr.rel (%p350) target = $region28
        $region27: #{tpu_custom_call.1} parent=11 // pred_region
          _
        $region28: #{tpu_custom_call.1} parent=11 // pred_fallthru
          _
        // Predicated region
        $region29: #{tpu_custom_call.1} parent=11 // pred_check
          %p353 = pneg %p153
        $region30: #{tpu_custom_call.1} parent=11 // pred_check_branch
          %355 = sbr.rel (%p353) target = $region32
        $region31: #{tpu_custom_call.1} parent=11 // pred_region
          _
        $region32: #{tpu_custom_call.1} parent=11 // pred_fallthru
          _
        // Predicated region
        $region33: #{tpu_custom_call.1} parent=11 // pred_check
          %p356 = pneg %p174
        $region34: #{tpu_custom_call.1} parent=11 // pred_check_branch
          %358 = sbr.rel (%p356) target = $region36
        $region35: #{tpu_custom_call.1} parent=11 // pred_region
          _
        $region36: #{tpu_custom_call.1} parent=11 // pred_fallthru
          _
        // Predicated region
        $region37: #{tpu_custom_call.1} parent=11 // pred_check
          %p359 = pneg %p195
        $region38: #{tpu_custom_call.1} parent=11 // pred_check_branch
          %361 = sbr.rel (%p359) target = $region40
        $region39: #{tpu_custom_call.1} parent=11 // pred_region
          _
        $region40: #{tpu_custom_call.1} parent=11 // pred_fallthru
          _
        // Predicated region
        $region41: #{tpu_custom_call.1} parent=11 // pred_check
          %p362 = pneg %p216
        $region42: #{tpu_custom_call.1} parent=11 // pred_check_branch
          %364 = sbr.rel (%p362) target = $region44
        $region43: #{tpu_custom_call.1} parent=11 // pred_region
          _
        $region44: #{tpu_custom_call.1} parent=11 // pred_fallthru
          _
        // Predicated region
        $region45: #{tpu_custom_call.1} parent=11 // pred_check
          %p365 = pneg %p237
        $region46: #{tpu_custom_call.1} parent=11 // pred_check_branch
          %367 = sbr.rel (%p365) target = $region48
        $region47: #{tpu_custom_call.1} parent=11 // pred_region
          _
        $region48: #{tpu_custom_call.1} parent=11 // pred_fallthru
          _
        // Predicated region
        $region49: #{tpu_custom_call.1} parent=11 // pred_check
          %p368 = pneg %p258
        $region50: #{tpu_custom_call.1} parent=11 // pred_check_branch
          %370 = sbr.rel (%p368) target = $region52
        $region51: #{tpu_custom_call.1} parent=11 // pred_region
          _
        $region52: #{tpu_custom_call.1} parent=11 // pred_fallthru
          _
        // Predicated region
        $region53: #{tpu_custom_call.1} parent=11 // pred_check
          %p371 = pneg %p279
        $region54: #{tpu_custom_call.1} parent=11 // pred_check_branch
          %373 = sbr.rel (%p371) target = $region56
        $region55: #{tpu_custom_call.1} parent=11 // pred_region
          _
        $region56: #{tpu_custom_call.1} parent=11 // pred_fallthru
          _
        // Predicated region
        $region57: #{tpu_custom_call.1} parent=11 // pred_check
          %p374 = pneg %p300
        $region58: #{tpu_custom_call.1} parent=11 // pred_check_branch
          %376 = sbr.rel (%p374) target = $region60
        $region59: #{tpu_custom_call.1} parent=11 // pred_region
          _
        $region60: #{tpu_custom_call.1} parent=11 // pred_fallthru
          _
      $region12: #{tpu_custom_call.1} parent=5 // pred_fallthru
        _
      %p377 = scmp.lt.s32.totalorder %s22, 2
      // Predicated region
      $region61: #{tpu_custom_call.1} parent=5 // pred_check
        %p378 = pneg %p377
      $region62: #{tpu_custom_call.1} parent=5 // pred_check_branch
        %380 = sbr.rel (%p378) target = $region64
      $region63: #{tpu_custom_call.1} parent=5 // pred_region
        // Predicated region
        $region65: #{tpu_custom_call.1} parent=63 // pred_check
          %p381 = pneg %p42
        $region66: #{tpu_custom_call.1} parent=63 // pred_check_branch
          %383 = sbr.rel (%p381) target = $region68
        $region67: #{tpu_custom_call.1} parent=63 // pred_region
          %p384 = scmp.lt.s32.totalorder %s22, 1
          %s385 = scalar_select %p384, %s22, 1
          %s386 = smul.addr %s385, 8
          %s387 = scalar_lea.vmem %s0, %s386
        $region68: #{tpu_custom_call.1} parent=63 // pred_fallthru
          _
      $region64: #{tpu_custom_call.1} parent=5 // pred_fallthru
        _
      %p388 = scmp.le.s32.totalorder 1, %s22
      %p389 = scmp.lt.s32.totalorder %s22, 3
      %p390 = pnand %p388, %p389
      %p391 = pneg %p390
      // Predicated region
      $region69: #{tpu_custom_call.1} parent=5 // pred_check
        _
      $region70: #{tpu_custom_call.1} parent=5 // pred_check_branch
        %393 = sbr.rel (%p390) target = $region72
      $region71: #{tpu_custom_call.1} parent=5 // pred_region
        %s394 = ssub.s32 %s22, 1
        %p395 = scmp.lt.s32.totalorder %s27, 1
        %s396 = scalar_select %p395, %s27, 1
        %s397 = smul.addr %s396, 8
        %s398 = scalar_lea.vmem %s0, %s397
        %p399 = pneg %p48
        %p400 = pneg %p45
        %p401 = pneg %p69
        %p402 = pneg %p66
        %p403 = pneg %p90
        %p404 = pneg %p87
        %p405 = pneg %p111
        %p406 = pneg %p108
        %p407 = pneg %p132
        %p408 = pneg %p129
        %p409 = pneg %p153
        %p410 = pneg %p150
        %p411 = pneg %p174
        %p412 = pneg %p171
        %p413 = pneg %p195
        %p414 = pneg %p192
        %p415 = pneg %p216
        %p416 = pneg %p213
        %p417 = pneg %p237
        %p418 = pneg %p234
        %p419 = pneg %p258
        %p420 = pneg %p255
        %p421 = pneg %p279
        %p422 = pneg %p276
        %p423 = pneg %p300
        %p424 = pneg %p297
        %p425 = pneg %p326
        %p426 = pneg %p323
        %s427 = sand.u32 %s313, 1
        %s428 = scalar_lea.sflag [#allocation3], %s427
        %s429 = sand.u32 %s313, 1
        %s430 = smul.addr %s429, 8
        %s431 = scalar_lea.vmem [#allocation2], %s430
        %p432 = scmp.lt.s32.totalorder %s27, 1
        %s433 = scalar_select %p432, %s27, 1
        %s434 = smul.addr %s433, 8
        %s435 = scalar_lea.vmem %s0, %s434
        %v437 = vld [vmem:[%s435] sm:$0xff]
        %v438 = vpack.c.bf16 %v437, %v437
        %v439 = vld [vmem:[%s1] sm:$0xff]
        %v440 = vld [vmem:[%s1 + $0x8] sm:$0xf]
        %v441 = vld [vmem:[%s1 + $0xc] sm:$0xff]
        %v442 = vld [vmem:[%s1 + $0x14] sm:$0xf]
        %v443 = vld [vmem:[%s1 + $0x18] sm:$0xff]
        %v444 = vld [vmem:[%s1 + $0x20] sm:$0xf]
        %v445 = vld [vmem:[%s1 + $0x24] sm:$0xff]
        %v446 = vld [vmem:[%s1 + $0x2c] sm:$0xf]
        %v447 = vld [vmem:[%s2] sm:$0x7]
        %v449 = vlaneseq
        %v450 = vshrl.u32 %v449, 7
        %v451 = vsub.s32 0, %v450
        %v452 = vrot.slane %v447, %v451
        %v453 = vlaneseq
        %v454 = vshrl.u32 %v453, 7
        %v455 = vsub.s32 1, %v454
        %v456 = vrot.slane %v447, %v455
        %v457 = vlaneseq
        %v458 = vshrl.u32 %v457, 7
        %v459 = vsub.s32 2, %v458
        %v460 = vrot.slane %v447, %v459
        %v472 = vunpack.c.l.b16 %v439
        %v473 = vunpack.c.h.b16 %v439
        %v474 = vunpack.c.l.b16 %v440
        %v475 = vunpack.c.l.b16 %v441
        %v476 = vunpack.c.h.b16 %v441
        %v477 = vunpack.c.l.b16 %v442
        %v478 = vunpack.c.l.b16 %v443
        %v479 = vunpack.c.h.b16 %v443
        %v480 = vunpack.c.l.b16 %v444
        %v481 = vunpack.c.l.b16 %v445
        %v482 = vunpack.c.h.b16 %v445
        %v483 = vunpack.c.l.b16 %v446
        %v484 = vpack.c.b16 %v475, %v472
        %v485 = vpack.c.b16 %v476, %v473
        %v486 = vpack.c.b16 %v477, %v474
        %v487 = vpack.c.b16 %v481, %v478
        %v488 = vpack.c.b16 %v482, %v479
        %v489 = vpack.c.b16 %v483, %v480
        %vm496 = vcmask 261120
        %v498 = vsel %vm496, %v438, 0
        %500 = vmatprep.subr.bf16.mxu0 0
        %501 = vmatpush1.bf16.msra.mxu0 0
        %502 = vmatprep.subr.bf16.mxu0 0
        %503 = vmatpush1.bf16.msra.mxu0 0
        %504 = vmatprep.subr.bf16.mxu0 0
        %505 = vmatpush1.bf16.msra.mxu0 0
        %506 = vmatprep.subr.bf16.mxu0 0
        %507 = vmatpush1.bf16.msra.mxu0 0
        %508 = vmatprep.subr.bf16.mxu0 0
        %509 = vmatpush1.bf16.msra.mxu0 0
        %510 = vmatprep.subr.bf16.mxu0 0
        %511 = vmatpush1.bf16.msra.mxu0 0
        %512 = vmatprep.subr.bf16.mxu0 %v488
        %513 = vmatpush1.bf16.msra.mxu0 %v487
        %514 = vmatprep.subr.bf16.mxu0 %v485
        %515 = vmatpush1.bf16.msra.mxu0 %v484
        %516 = vmatprep.subr.bf16.mxu0 0
        %517 = vmatpush2.bf16.msra.mxu0 0
        %518 = vmatprep.subr.bf16.mxu0 0
        %519 = vmatpush2.bf16.msra.mxu0 0
        %520 = vmatprep.subr.bf16.mxu0 0
        %521 = vmatpush2.bf16.msra.mxu0 0
        %522 = vmatprep.subr.bf16.mxu0 0
        %523 = vmatpush2.bf16.msra.mxu0 0
        %524 = vmatprep.subr.bf16.mxu0 0
        %525 = vmatpush2.bf16.msra.mxu0 0
        %526 = vmatprep.subr.bf16.mxu0 0
        %527 = vmatpush2.bf16.msra.mxu0 0
        %528 = vmatprep.subr.bf16.mxu0 0
        %529 = vmatpush2.bf16.msra.mxu0 0
        %530 = vmatprep.subr.bf16.mxu0 0
        %531 = vmatpush2.bf16.msra.mxu0 0
        %532 = vmatprep.mubr.bf16.mxu0 0
        %533 = vmatmul.mubr.bf16.gmra.mxu0 %v498
        %v534 = vpop.f32.mrf.mxu0
        %v535 = vadd.f32 %v452, %v534
        %v536 = vpop.f32.mrf.mxu0
        %v537 = vadd.f32 %v456, %v536
        %v538 = vpop.f32.mrf.mxu0
        %v539 = vpop.f32.mrf.mxu0
        %540 = vdwg.mxu0
        %541 = vmatprep.subr.bf16.mxu0 0
        %542 = vmatpush1.bf16.msra.mxu0 0
        %543 = vmatprep.subr.bf16.mxu0 0
        %544 = vmatpush1.bf16.msra.mxu0 0
        %545 = vmatprep.subr.bf16.mxu0 0
        %546 = vmatpush1.bf16.msra.mxu0 0
        %547 = vmatprep.subr.bf16.mxu0 0
        %548 = vmatpush1.bf16.msra.mxu0 0
        %549 = vmatprep.subr.bf16.mxu0 0
        %550 = vmatpush1.bf16.msra.mxu0 0
        %551 = vmatprep.subr.bf16.mxu0 0
        %552 = vmatpush1.bf16.msra.mxu0 0
        %553 = vmatprep.subr.bf16.mxu0 0
        %554 = vmatpush1.bf16.msra.mxu0 %v489
        %555 = vmatprep.subr.bf16.mxu0 0
        %556 = vmatpush1.bf16.msra.mxu0 %v486
        %557 = vmatprep.subr.bf16.mxu0 0
        %558 = vmatpush2.bf16.msra.mxu0 0
        %559 = vmatprep.subr.bf16.mxu0 0
        %560 = vmatpush2.bf16.msra.mxu0 0
        %561 = vmatprep.subr.bf16.mxu0 0
        %562 = vmatpush2.bf16.msra.mxu0 0
        %563 = vmatprep.subr.bf16.mxu0 0
        %564 = vmatpush2.bf16.msra.mxu0 0
        %565 = vmatprep.subr.bf16.mxu0 0
        %566 = vmatpush2.bf16.msra.mxu0 0
        %567 = vmatprep.subr.bf16.mxu0 0
        %568 = vmatpush2.bf16.msra.mxu0 0
        %569 = vmatprep.subr.bf16.mxu0 0
        %570 = vmatpush2.bf16.msra.mxu0 0
        %571 = vmatprep.subr.bf16.mxu0 0
        %572 = vmatpush2.bf16.msra.mxu0 0
        %573 = vmatprep.mubr.bf16.mxu0 0
        %574 = vmatmul.mubr.bf16.gmra.mxu0 %v498
        %v575 = vpop.f32.mrf.mxu0
        %v576 = vadd.f32 %v460, %v575
        %v577 = vpop.f32.mrf.mxu0
        %v578 = vpop.f32.mrf.mxu0
        %v579 = vpop.f32.mrf.mxu0
        %580 = vdwg.mxu0
        %v581 = vpack.c.bf16 %v535, %v535
        %v582 = vpack.c.bf16 %v537, %v537
        %v583 = vpack.c.bf16 %v576, %v576
        %585 = vrot.lane.b32.xlu0 %v581, 96
        %v586 = vpop.permute.xlu0 %585
        %587 = vrot.lane.b32.xlu0 %v581, 64
        %v588 = vpop.permute.xlu0 %587
        %589 = vrot.lane.b32.xlu0 %v581, 32
        %v590 = vpop.permute.xlu0 %589
        %592 = vrot.lane.b32.xlu0 %v582, 96
        %v593 = vpop.permute.xlu0 %592
        %594 = vrot.lane.b32.xlu0 %v582, 64
        %v595 = vpop.permute.xlu0 %594
        %596 = vrot.lane.b32.xlu0 %v582, 32
        %v597 = vpop.permute.xlu0 %596
        %599 = vrot.lane.b32.xlu0 %v583, 96
        %v600 = vpop.permute.xlu0 %599
        %601 = vrot.lane.b32.xlu0 %v583, 64
        %v602 = vpop.permute.xlu0 %601
        %603 = vrot.lane.b32.xlu0 %v583, 32
        %v604 = vpop.permute.xlu0 %603
        %v606 = vsel %vm496, %v582, 0
        %v609 = vsel %vm496, %v581, 0
        %611 = vmatprep.subr.bf16.mxu0 0
        %612 = vmatpush1.bf16.xpose.msra.mxu0 0
        %613 = vmatprep.subr.bf16.mxu0 0
        %614 = vmatpush1.bf16.xpose.msra.mxu0 0
        %615 = vmatprep.subr.bf16.mxu0 0
        %616 = vmatpush1.bf16.xpose.msra.mxu0 0
        %617 = vmatprep.subr.bf16.mxu0 0
        %618 = vmatpush1.bf16.xpose.msra.mxu0 0
        %619 = vmatprep.subr.bf16.mxu0 0
        %620 = vmatpush1.bf16.xpose.msra.mxu0 0
        %621 = vmatprep.subr.bf16.mxu0 0
        %622 = vmatpush1.bf16.xpose.msra.mxu0 0
        %623 = vmatprep.subr.bf16.mxu0 0
        %624 = vmatpush1.bf16.xpose.msra.mxu0 0
        %625 = vmatprep.subr.bf16.mxu0 0
        %626 = vmatpush1.bf16.xpose.msra.mxu0 %v609
        %627 = vmatprep.subr.bf16.mxu0 0
        %628 = vmatpush2.bf16.xpose.msra.mxu0 0
        %629 = vmatprep.subr.bf16.mxu0 0
        %630 = vmatpush2.bf16.xpose.msra.mxu0 0
        %631 = vmatprep.subr.bf16.mxu0 0
        %632 = vmatpush2.bf16.xpose.msra.mxu0 0
        %633 = vmatprep.subr.bf16.mxu0 0
        %634 = vmatpush2.bf16.xpose.msra.mxu0 0
        %635 = vmatprep.subr.bf16.mxu0 0
        %636 = vmatpush2.bf16.xpose.msra.mxu0 0
        %637 = vmatprep.subr.bf16.mxu0 0
        %638 = vmatpush2.bf16.xpose.msra.mxu0 0
        %639 = vmatprep.subr.bf16.mxu0 0
        %640 = vmatpush2.bf16.xpose.msra.mxu0 0
        %641 = vmatprep.subr.bf16.mxu0 0
        %642 = vmatpush2.bf16.xpose.msra.mxu0 0
        %643 = vmatprep.mubr.bf16.mxu0 0
        %644 = vmatmul.mubr.bf16.gmra.mxu0 %v606
        %v645 = vpop.f32.mrf.mxu0
        %v646 = vadd.f32 0.0, %v645
        %v647 = vpop.f32.mrf.mxu0
        %v648 = vpop.f32.mrf.mxu0
        %v649 = vpop.f32.mrf.mxu0
        %650 = vdwg.mxu0
        %v652 = vsel %vm496, %v593, 0
        %v655 = vsel %vm496, %v586, 0
        %657 = vmatprep.subr.bf16.mxu0 0
        %658 = vmatpush1.bf16.xpose.msra.mxu0 0
        %659 = vmatprep.subr.bf16.mxu0 0
        %660 = vmatpush1.bf16.xpose.msra.mxu0 0
        %661 = vmatprep.subr.bf16.mxu0 0
        %662 = vmatpush1.bf16.xpose.msra.mxu0 0
        %663 = vmatprep.subr.bf16.mxu0 0
        %664 = vmatpush1.bf16.xpose.msra.mxu0 0
        %665 = vmatprep.subr.bf16.mxu0 0
        %666 = vmatpush1.bf16.xpose.msra.mxu0 0
        %667 = vmatprep.subr.bf16.mxu0 0
        %668 = vmatpush1.bf16.xpose.msra.mxu0 0
        %669 = vmatprep.subr.bf16.mxu0 0
        %670 = vmatpush1.bf16.xpose.msra.mxu0 0
        %671 = vmatprep.subr.bf16.mxu0 0
        %672 = vmatpush1.bf16.xpose.msra.mxu0 %v655
        %673 = vmatprep.subr.bf16.mxu0 0
        %674 = vmatpush2.bf16.xpose.msra.mxu0 0
        %675 = vmatprep.subr.bf16.mxu0 0
        %676 = vmatpush2.bf16.xpose.msra.mxu0 0
        %677 = vmatprep.subr.bf16.mxu0 0
        %678 = vmatpush2.bf16.xpose.msra.mxu0 0
        %679 = vmatprep.subr.bf16.mxu0 0
        %680 = vmatpush2.bf16.xpose.msra.mxu0 0
        %681 = vmatprep.subr.bf16.mxu0 0
        %682 = vmatpush2.bf16.xpose.msra.mxu0 0
        %683 = vmatprep.subr.bf16.mxu0 0
        %684 = vmatpush2.bf16.xpose.msra.mxu0 0
        %685 = vmatprep.subr.bf16.mxu0 0
        %686 = vmatpush2.bf16.xpose.msra.mxu0 0
        %687 = vmatprep.subr.bf16.mxu0 0
        %688 = vmatpush2.bf16.xpose.msra.mxu0 0
        %689 = vmatprep.mubr.bf16.mxu0 0
        %690 = vmatmul.mubr.bf16.gmra.mxu0 %v652
        %v691 = vpop.f32.mrf.mxu0
        %v692 = vadd.f32 0.0, %v691
        %v693 = vpop.f32.mrf.mxu0
        %v694 = vpop.f32.mrf.mxu0
        %v695 = vpop.f32.mrf.mxu0
        %696 = vdwg.mxu0
        %v698 = vsel %vm496, %v595, 0
        %v701 = vsel %vm496, %v588, 0
        %703 = vmatprep.subr.bf16.mxu0 0
        %704 = vmatpush1.bf16.xpose.msra.mxu0 0
        %705 = vmatprep.subr.bf16.mxu0 0
        %706 = vmatpush1.bf16.xpose.msra.mxu0 0
        %707 = vmatprep.subr.bf16.mxu0 0
        %708 = vmatpush1.bf16.xpose.msra.mxu0 0
        %709 = vmatprep.subr.bf16.mxu0 0
        %710 = vmatpush1.bf16.xpose.msra.mxu0 0
        %711 = vmatprep.subr.bf16.mxu0 0
        %712 = vmatpush1.bf16.xpose.msra.mxu0 0
        %713 = vmatprep.subr.bf16.mxu0 0
        %714 = vmatpush1.bf16.xpose.msra.mxu0 0
        %715 = vmatprep.subr.bf16.mxu0 0
        %716 = vmatpush1.bf16.xpose.msra.mxu0 0
        %717 = vmatprep.subr.bf16.mxu0 0
        %718 = vmatpush1.bf16.xpose.msra.mxu0 %v701
        %719 = vmatprep.subr.bf16.mxu0 0
        %720 = vmatpush2.bf16.xpose.msra.mxu0 0
        %721 = vmatprep.subr.bf16.mxu0 0
        %722 = vmatpush2.bf16.xpose.msra.mxu0 0
        %723 = vmatprep.subr.bf16.mxu0 0
        %724 = vmatpush2.bf16.xpose.msra.mxu0 0
        %725 = vmatprep.subr.bf16.mxu0 0
        %726 = vmatpush2.bf16.xpose.msra.mxu0 0
        %727 = vmatprep.subr.bf16.mxu0 0
        %728 = vmatpush2.bf16.xpose.msra.mxu0 0
        %729 = vmatprep.subr.bf16.mxu0 0
        %730 = vmatpush2.bf16.xpose.msra.mxu0 0
        %731 = vmatprep.subr.bf16.mxu0 0
        %732 = vmatpush2.bf16.xpose.msra.mxu0 0
        %733 = vmatprep.subr.bf16.mxu0 0
        %734 = vmatpush2.bf16.xpose.msra.mxu0 0
        %735 = vmatprep.mubr.bf16.mxu0 0
        %736 = vmatmul.mubr.bf16.gmra.mxu0 %v698
        %v737 = vpop.f32.mrf.mxu0
        %v738 = vadd.f32 0.0, %v737
        %v739 = vpop.f32.mrf.mxu0
        %v740 = vpop.f32.mrf.mxu0
        %v741 = vpop.f32.mrf.mxu0
        %742 = vdwg.mxu0
        %v744 = vsel %vm496, %v597, 0
        %v747 = vsel %vm496, %v590, 0
        %749 = vmatprep.subr.bf16.mxu0 0
        %750 = vmatpush1.bf16.xpose.msra.mxu0 0
        %751 = vmatprep.subr.bf16.mxu0 0
        %752 = vmatpush1.bf16.xpose.msra.mxu0 0
        %753 = vmatprep.subr.bf16.mxu0 0
        %754 = vmatpush1.bf16.xpose.msra.mxu0 0
        %755 = vmatprep.subr.bf16.mxu0 0
        %756 = vmatpush1.bf16.xpose.msra.mxu0 0
        %757 = vmatprep.subr.bf16.mxu0 0
        %758 = vmatpush1.bf16.xpose.msra.mxu0 0
        %759 = vmatprep.subr.bf16.mxu0 0
        %760 = vmatpush1.bf16.xpose.msra.mxu0 0
        %761 = vmatprep.subr.bf16.mxu0 0
        %762 = vmatpush1.bf16.xpose.msra.mxu0 0
        %763 = vmatprep.subr.bf16.mxu0 0
        %764 = vmatpush1.bf16.xpose.msra.mxu0 %v747
        %765 = vmatprep.subr.bf16.mxu0 0
        %766 = vmatpush2.bf16.xpose.msra.mxu0 0
        %767 = vmatprep.subr.bf16.mxu0 0
        %768 = vmatpush2.bf16.xpose.msra.mxu0 0
        %769 = vmatprep.subr.bf16.mxu0 0
        %770 = vmatpush2.bf16.xpose.msra.mxu0 0
        %771 = vmatprep.subr.bf16.mxu0 0
        %772 = vmatpush2.bf16.xpose.msra.mxu0 0
        %773 = vmatprep.subr.bf16.mxu0 0
        %774 = vmatpush2.bf16.xpose.msra.mxu0 0
        %775 = vmatprep.subr.bf16.mxu0 0
        %776 = vmatpush2.bf16.xpose.msra.mxu0 0
        %777 = vmatprep.subr.bf16.mxu0 0
        %778 = vmatpush2.bf16.xpose.msra.mxu0 0
        %779 = vmatprep.subr.bf16.mxu0 0
        %780 = vmatpush2.bf16.xpose.msra.mxu0 0
        %781 = vmatprep.mubr.bf16.mxu0 0
        %782 = vmatmul.mubr.bf16.gmra.mxu0 %v744
        %v783 = vpop.f32.mrf.mxu0
        %v784 = vadd.f32 0.0, %v783
        %v785 = vpop.f32.mrf.mxu0
        %v786 = vpop.f32.mrf.mxu0
        %v787 = vpop.f32.mrf.mxu0
        %788 = vdwg.mxu0
        %vm789 = vcmask 64512
        %v790 = vsel %vm789, %v646, -inf
        %791 = vmax.xlane.f32.xlu0 %v790
        %v792 = vpop.xlane.xlu0 %791
        %v793 = vsel %vm789, %v692, -inf
        %794 = vmax.xlane.f32.xlu0 %v793
        %v795 = vpop.xlane.xlu0 %794
        %v796 = vsel %vm789, %v738, -inf
        %797 = vmax.xlane.f32.xlu0 %v796
        %v798 = vpop.xlane.xlu0 %797
        %v799 = vsel %vm789, %v784, -inf
        %800 = vmax.xlane.f32.xlu0 %v799
        %v801 = vpop.xlane.xlu0 %800
        %v802 = vsub.f32 %v646, %v792
        %v803 = vsub.f32 %v692, %v795
        %v804 = vsub.f32 %v738, %v798
        %v805 = vsub.f32 %v784, %v801
        %v806 = vmul.f32 %v802, 1.442695
        %v807 = vpow.pop %v806
        %v808 = vmul.f32 %v803, 1.442695
        %v809 = vpow.pop %v808
        %v810 = vmul.f32 %v804, 1.442695
        %v811 = vpow.pop %v810
        %v812 = vmul.f32 %v805, 1.442695
        %v813 = vpow.pop %v812
        %v814 = vsel %vm789, %v807, 0.0
        %815 = vadd.xlane.f32.xlu0 %v814
        %v816 = vpop.xlane.xlu0 %815
        %v817 = vsel %vm789, %v809, 0.0
        %818 = vadd.xlane.f32.xlu0 %v817
        %v819 = vpop.xlane.xlu0 %818
        %v820 = vsel %vm789, %v811, 0.0
        %821 = vadd.xlane.f32.xlu0 %v820
        %v822 = vpop.xlane.xlu0 %821
        %v823 = vsel %vm789, %v813, 0.0
        %824 = vadd.xlane.f32.xlu0 %v823
        %v825 = vpop.xlane.xlu0 %824
        %v826 = vpack.c.bf16 %v807, %v807
        %v827 = vpack.c.bf16 %v809, %v809
        %v828 = vpack.c.bf16 %v811, %v811
        %v829 = vpack.c.bf16 %v813, %v813
        %v831 = vsel %vm789, %v826, 0
        %vm833 = vcmask 1043456
        %v835 = vsel %vm833, %v583, 0
        %837 = vmatprep.subr.bf16.mxu0 0
        %838 = vmatpush1.bf16.msra.mxu0 0
        %839 = vmatprep.subr.bf16.mxu0 0
        %840 = vmatpush1.bf16.msra.mxu0 0
        %841 = vmatprep.subr.bf16.mxu0 0
        %842 = vmatpush1.bf16.msra.mxu0 0
        %843 = vmatprep.subr.bf16.mxu0 0
        %844 = vmatpush1.bf16.msra.mxu0 0
        %845 = vmatprep.subr.bf16.mxu0 0
        %846 = vmatpush1.bf16.msra.mxu0 0
        %847 = vmatprep.subr.bf16.mxu0 0
        %848 = vmatpush1.bf16.msra.mxu0 0
        %849 = vmatprep.subr.bf16.mxu0 0
        %850 = vmatpush1.bf16.msra.mxu0 0
        %851 = vmatprep.subr.bf16.mxu0 0
        %852 = vmatpush1.bf16.msra.mxu0 %v835
        %853 = vmatprep.subr.bf16.mxu0 0
        %854 = vmatpush2.bf16.msra.mxu0 0
        %855 = vmatprep.subr.bf16.mxu0 0
        %856 = vmatpush2.bf16.msra.mxu0 0
        %857 = vmatprep.subr.bf16.mxu0 0
        %858 = vmatpush2.bf16.msra.mxu0 0
        %859 = vmatprep.subr.bf16.mxu0 0
        %860 = vmatpush2.bf16.msra.mxu0 0
        %861 = vmatprep.subr.bf16.mxu0 0
        %862 = vmatpush2.bf16.msra.mxu0 0
        %863 = vmatprep.subr.bf16.mxu0 0
        %864 = vmatpush2.bf16.msra.mxu0 0
        %865 = vmatprep.subr.bf16.mxu0 0
        %866 = vmatpush2.bf16.msra.mxu0 0
        %867 = vmatprep.subr.bf16.mxu0 0
        %868 = vmatpush2.bf16.msra.mxu0 0
        %869 = vmatprep.mubr.bf16.mxu0 0
        %870 = vmatmul.mubr.bf16.gmra.mxu0 %v831
        %v871 = vpop.f32.mrf.mxu0
        %v872 = vadd.f32 0.0, %v871
        %v873 = vpop.f32.mrf.mxu0
        %v874 = vpop.f32.mrf.mxu0
        %v875 = vpop.f32.mrf.mxu0
        %876 = vdwg.mxu0
        %v878 = vsel %vm789, %v827, 0
        %v881 = vsel %vm833, %v600, 0
        %883 = vmatprep.subr.bf16.mxu0 0
        %884 = vmatpush1.bf16.msra.mxu0 0
        %885 = vmatprep.subr.bf16.mxu0 0
        %886 = vmatpush1.bf16.msra.mxu0 0
        %887 = vmatprep.subr.bf16.mxu0 0
        %888 = vmatpush1.bf16.msra.mxu0 0
        %889 = vmatprep.subr.bf16.mxu0 0
        %890 = vmatpush1.bf16.msra.mxu0 0
        %891 = vmatprep.subr.bf16.mxu0 0
        %892 = vmatpush1.bf16.msra.mxu0 0
        %893 = vmatprep.subr.bf16.mxu0 0
        %894 = vmatpush1.bf16.msra.mxu0 0
        %895 = vmatprep.subr.bf16.mxu0 0
        %896 = vmatpush1.bf16.msra.mxu0 0
        %897 = vmatprep.subr.bf16.mxu0 0
        %898 = vmatpush1.bf16.msra.mxu0 %v881
        %899 = vmatprep.subr.bf16.mxu0 0
        %900 = vmatpush2.bf16.msra.mxu0 0
        %901 = vmatprep.subr.bf16.mxu0 0
        %902 = vmatpush2.bf16.msra.mxu0 0
        %903 = vmatprep.subr.bf16.mxu0 0
        %904 = vmatpush2.bf16.msra.mxu0 0
        %905 = vmatprep.subr.bf16.mxu0 0
        %906 = vmatpush2.bf16.msra.mxu0 0
        %907 = vmatprep.subr.bf16.mxu0 0
        %908 = vmatpush2.bf16.msra.mxu0 0
        %909 = vmatprep.subr.bf16.mxu0 0
        %910 = vmatpush2.bf16.msra.mxu0 0
        %911 = vmatprep.subr.bf16.mxu0 0
        %912 = vmatpush2.bf16.msra.mxu0 0
        %913 = vmatprep.subr.bf16.mxu0 0
        %914 = vmatpush2.bf16.msra.mxu0 0
        %915 = vmatprep.mubr.bf16.mxu0 0
        %916 = vmatmul.mubr.bf16.gmra.mxu0 %v878
        %v917 = vpop.f32.mrf.mxu0
        %v918 = vadd.f32 0.0, %v917
        %v919 = vpop.f32.mrf.mxu0
        %v920 = vpop.f32.mrf.mxu0
        %v921 = vpop.f32.mrf.mxu0
        %922 = vdwg.mxu0
        %v924 = vsel %vm789, %v828, 0
        %v927 = vsel %vm833, %v602, 0
        %929 = vmatprep.subr.bf16.mxu0 0
        %930 = vmatpush1.bf16.msra.mxu0 0
        %931 = vmatprep.subr.bf16.mxu0 0
        %932 = vmatpush1.bf16.msra.mxu0 0
        %933 = vmatprep.subr.bf16.mxu0 0
        %934 = vmatpush1.bf16.msra.mxu0 0
        %935 = vmatprep.subr.bf16.mxu0 0
        %936 = vmatpush1.bf16.msra.mxu0 0
        %937 = vmatprep.subr.bf16.mxu0 0
        %938 = vmatpush1.bf16.msra.mxu0 0
        %939 = vmatprep.subr.bf16.mxu0 0
        %940 = vmatpush1.bf16.msra.mxu0 0
        %941 = vmatprep.subr.bf16.mxu0 0
        %942 = vmatpush1.bf16.msra.mxu0 0
        %943 = vmatprep.subr.bf16.mxu0 0
        %944 = vmatpush1.bf16.msra.mxu0 %v927
        %945 = vmatprep.subr.bf16.mxu0 0
        %946 = vmatpush2.bf16.msra.mxu0 0
        %947 = vmatprep.subr.bf16.mxu0 0
        %948 = vmatpush2.bf16.msra.mxu0 0
        %949 = vmatprep.subr.bf16.mxu0 0
        %950 = vmatpush2.bf16.msra.mxu0 0
        %951 = vmatprep.subr.bf16.mxu0 0
        %952 = vmatpush2.bf16.msra.mxu0 0
        %953 = vmatprep.subr.bf16.mxu0 0
        %954 = vmatpush2.bf16.msra.mxu0 0
        %955 = vmatprep.subr.bf16.mxu0 0
        %956 = vmatpush2.bf16.msra.mxu0 0
        %957 = vmatprep.subr.bf16.mxu0 0
        %958 = vmatpush2.bf16.msra.mxu0 0
        %959 = vmatprep.subr.bf16.mxu0 0
        %960 = vmatpush2.bf16.msra.mxu0 0
        %961 = vmatprep.mubr.bf16.mxu0 0
        %962 = vmatmul.mubr.bf16.gmra.mxu0 %v924
        %v963 = vpop.f32.mrf.mxu0
        %v964 = vadd.f32 0.0, %v963
        %v965 = vpop.f32.mrf.mxu0
        %v966 = vpop.f32.mrf.mxu0
        %v967 = vpop.f32.mrf.mxu0
        %968 = vdwg.mxu0
        %v970 = vsel %vm789, %v829, 0
        %v973 = vsel %vm833, %v604, 0
        %975 = vmatprep.subr.bf16.mxu0 0
        %976 = vmatpush1.bf16.msra.mxu0 0
        %977 = vmatprep.subr.bf16.mxu0 0
        %978 = vmatpush1.bf16.msra.mxu0 0
        %979 = vmatprep.subr.bf16.mxu0 0
        %980 = vmatpush1.bf16.msra.mxu0 0
        %981 = vmatprep.subr.bf16.mxu0 0
        %982 = vmatpush1.bf16.msra.mxu0 0
        %983 = vmatprep.subr.bf16.mxu0 0
        %984 = vmatpush1.bf16.msra.mxu0 0
        %985 = vmatprep.subr.bf16.mxu0 0
        %986 = vmatpush1.bf16.msra.mxu0 0
        %987 = vmatprep.subr.bf16.mxu0 0
        %988 = vmatpush1.bf16.msra.mxu0 0
        %989 = vmatprep.subr.bf16.mxu0 0
        %990 = vmatpush1.bf16.msra.mxu0 %v973
        %991 = vmatprep.subr.bf16.mxu0 0
        %992 = vmatpush2.bf16.msra.mxu0 0
        %993 = vmatprep.subr.bf16.mxu0 0
        %994 = vmatpush2.bf16.msra.mxu0 0
        %995 = vmatprep.subr.bf16.mxu0 0
        %996 = vmatpush2.bf16.msra.mxu0 0
        %997 = vmatprep.subr.bf16.mxu0 0
        %998 = vmatpush2.bf16.msra.mxu0 0
        %999 = vmatprep.subr.bf16.mxu0 0
        %1000 = vmatpush2.bf16.msra.mxu0 0
        %1001 = vmatprep.subr.bf16.mxu0 0
        %1002 = vmatpush2.bf16.msra.mxu0 0
        %1003 = vmatprep.subr.bf16.mxu0 0
        %1004 = vmatpush2.bf16.msra.mxu0 0
        %1005 = vmatprep.subr.bf16.mxu0 0
        %1006 = vmatpush2.bf16.msra.mxu0 0
        %1007 = vmatprep.mubr.bf16.mxu0 0
        %1008 = vmatmul.mubr.bf16.gmra.mxu0 %v970
        %v1009 = vpop.f32.mrf.mxu0
        %v1010 = vadd.f32 0.0, %v1009
        %v1011 = vpop.f32.mrf.mxu0
        %v1012 = vpop.f32.mrf.mxu0
        %v1013 = vpop.f32.mrf.mxu0
        %1014 = vdwg.mxu0
        %v1015 = vrcp.pop %v816
        %v1016 = vrcp.pop %v819
        %v1017 = vrcp.pop %v822
        %v1018 = vrcp.pop %v825
        %v1019 = vmul.f32 %v872, %v1015
        %v1020 = vmul.f32 %v918, %v1016
        %v1021 = vmul.f32 %v964, %v1017
        %v1022 = vmul.f32 %v1010, %v1018
        %1024 = vrot.lane.b32.xlu0 %v1020, 32
        %v1025 = vpop.permute.xlu0 %1024
        %1028 = vrot.lane.b32.xlu0 %v1021, 64
        %v1029 = vpop.permute.xlu0 %1028
        %1032 = vrot.lane.b32.xlu0 %v1022, 96
        %v1033 = vpop.permute.xlu0 %1032
        %v1035 = vsel %vm496, %v1019, %v1025
        %vm1036 = vcmask 523264
        %v1037 = vsel %vm1036, %v1035, %v1029
        %vm1038 = vcmask 785408
        %v1039 = vsel %vm1038, %v1037, %v1033
        %v1040 = vpack.c.bf16 %v1039, %v1039
        %v1041 = vld [vmem:[%s3] sm:$0xf]
        %v1042 = vld [vmem:[%s3 + $0x4] sm:$0xf]
        %v1043 = vld [vmem:[%s3 + $0x8] sm:$0xf]
        %v1044 = vld [vmem:[%s3 + $0xc] sm:$0xf]
        %v1045 = vld [vmem:[%s3 + $0x10] sm:$0xf]
        %v1046 = vld [vmem:[%s3 + $0x14] sm:$0xf]
        %v1047 = vld [vmem:[%s3 + $0x18] sm:$0xf]
        %v1048 = vld [vmem:[%s3 + $0x1c] sm:$0xf]
        %v1049 = vld [vmem:[%s3 + $0x20] sm:$0xf]
        %v1050 = vld [vmem:[%s3 + $0x24] sm:$0xf]
        %v1051 = vld [vmem:[%s3 + $0x28] sm:$0xf]
        %v1052 = vld [vmem:[%s3 + $0x2c] sm:$0xf]
        %v1053 = vld [vmem:[%s3 + $0x30] sm:$0xf]
        %v1054 = vld [vmem:[%s3 + $0x34] sm:$0xf]
        %v1055 = vld [vmem:[%s3 + $0x38] sm:$0xf]
        %v1056 = vld [vmem:[%s3 + $0x3c] sm:$0xf]
        %v1057 = vld [vmem:[%s4] sm:$0x1]
        %v1059 = vlaneseq
        %v1060 = vshrl.u32 %v1059, 7
        %v1061 = vsub.s32 0, %v1060
        %v1062 = vrot.slane %v1057, %v1061
        %v1080 = vunpack.c.l.b16 %v1041
        %v1081 = vunpack.c.l.b16 %v1042
        %v1082 = vunpack.c.l.b16 %v1043
        %v1083 = vunpack.c.l.b16 %v1044
        %v1084 = vunpack.c.l.b16 %v1045
        %v1085 = vunpack.c.l.b16 %v1046
        %v1086 = vunpack.c.l.b16 %v1047
        %v1087 = vunpack.c.l.b16 %v1048
        %v1088 = vunpack.c.l.b16 %v1049
        %v1089 = vunpack.c.l.b16 %v1050
        %v1090 = vunpack.c.l.b16 %v1051
        %v1091 = vunpack.c.l.b16 %v1052
        %v1092 = vunpack.c.l.b16 %v1053
        %v1093 = vunpack.c.l.b16 %v1054
        %v1094 = vunpack.c.l.b16 %v1055
        %v1095 = vunpack.c.l.b16 %v1056
        %v1096 = vpack.c.b16 %v1081, %v1080
        %v1097 = vpack.c.b16 %v1083, %v1082
        %v1098 = vpack.c.b16 %v1085, %v1084
        %v1099 = vpack.c.b16 %v1087, %v1086
        %v1100 = vpack.c.b16 %v1089, %v1088
        %v1101 = vpack.c.b16 %v1091, %v1090
        %v1102 = vpack.c.b16 %v1093, %v1092
        %v1103 = vpack.c.b16 %v1095, %v1094
        %1112 = vmatprep.subr.bf16.mxu0 0
        %1113 = vmatpush1.bf16.msra.mxu0 %v1103
        %1114 = vmatprep.subr.bf16.mxu0 0
        %1115 = vmatpush1.bf16.msra.mxu0 %v1102
        %1116 = vmatprep.subr.bf16.mxu0 0
        %1117 = vmatpush1.bf16.msra.mxu0 %v1101
        %1118 = vmatprep.subr.bf16.mxu0 0
        %1119 = vmatpush1.bf16.msra.mxu0 %v1100
        %1120 = vmatprep.subr.bf16.mxu0 0
        %1121 = vmatpush1.bf16.msra.mxu0 %v1099
        %1122 = vmatprep.subr.bf16.mxu0 0
        %1123 = vmatpush1.bf16.msra.mxu0 %v1098
        %1124 = vmatprep.subr.bf16.mxu0 0
        %1125 = vmatpush1.bf16.msra.mxu0 %v1097
        %1126 = vmatprep.subr.bf16.mxu0 0
        %1127 = vmatpush1.bf16.msra.mxu0 %v1096
        %1128 = vmatprep.subr.bf16.mxu0 0
        %1129 = vmatpush2.bf16.msra.mxu0 0
        %1130 = vmatprep.subr.bf16.mxu0 0
        %1131 = vmatpush2.bf16.msra.mxu0 0
        %1132 = vmatprep.subr.bf16.mxu0 0
        %1133 = vmatpush2.bf16.msra.mxu0 0
        %1134 = vmatprep.subr.bf16.mxu0 0
        %1135 = vmatpush2.bf16.msra.mxu0 0
        %1136 = vmatprep.subr.bf16.mxu0 0
        %1137 = vmatpush2.bf16.msra.mxu0 0
        %1138 = vmatprep.subr.bf16.mxu0 0
        %1139 = vmatpush2.bf16.msra.mxu0 0
        %1140 = vmatprep.subr.bf16.mxu0 0
        %1141 = vmatpush2.bf16.msra.mxu0 0
        %1142 = vmatprep.subr.bf16.mxu0 0
        %1143 = vmatpush2.bf16.msra.mxu0 0
        %1144 = vmatprep.mubr.bf16.mxu0 0
        %1145 = vmatmul.mubr.bf16.gmra.mxu0 %v1040
        %v1146 = vpop.f32.mrf.mxu0
        %v1147 = vadd.f32 %v1062, %v1146
        %v1148 = vpop.f32.mrf.mxu0
        %v1149 = vpop.f32.mrf.mxu0
        %v1150 = vpop.f32.mrf.mxu0
        %1151 = vdwg.mxu0
        %v1152 = vadd.f32 %v1147, %v437
        %v1153 = vld [vmem:[%s5] sm:$0x1]
        %v1154 = vld [vmem:[%s6] sm:$0x1]
        %v1155 = vsel %vm496, %v1152, 0.0
        %1156 = vadd.xlane.f32.xlu0 %v1155
        %v1157 = vpop.xlane.xlu0 %1156
        %v1158 = vrcp.pop 32.0
        %v1159 = vmul.f32 %v1157, %v1158
        %v1160 = vsub.f32 %v1152, %v1159
        %v1161 = vmul.f32 %v1160, %v1160
        %v1162 = vsel %vm496, %v1161, 0.0
        %1163 = vadd.xlane.f32.xlu0 %v1162
        %v1164 = vpop.xlane.xlu0 %1163
        %v1165 = vmul.f32 %v1164, %v1158
        %v1166 = vadd.f32 %v1165, 1e-05
        %v1167 = vrsqrt.pop %v1166
        %v1168 = vmul.f32 %v1160, %v1167
        %v1170 = vlaneseq
        %v1171 = vshrl.u32 %v1170, 7
        %v1172 = vsub.s32 0, %v1171
        %v1173 = vrot.slane %v1153, %v1172
        %v1175 = vmul.f32 %v1168, %v1173
        %v1177 = vlaneseq
        %v1178 = vshrl.u32 %v1177, 7
        %v1179 = vsub.s32 0, %v1178
        %v1180 = vrot.slane %v1154, %v1179
        %v1182 = vadd.f32 %v1175, %v1180
        %v1183 = vpack.c.bf16 %v1182, %v1182
        %v1184 = vld [vmem:[%s7] sm:$0xf]
        %v1185 = vld [vmem:[%s7 + $0x4] sm:$0xf]
        %v1186 = vld [vmem:[%s7 + $0x8] sm:$0xf]
        %v1187 = vld [vmem:[%s7 + $0xc] sm:$0xf]
        %v1188 = vld [vmem:[%s8] sm:$0x1]
        %v1190 = vlaneseq
        %v1191 = vshrl.u32 %v1190, 7
        %v1192 = vsub.s32 0, %v1191
        %v1193 = vrot.slane %v1188, %v1192
        %v1199 = vunpack.c.l.b16 %v1184
        %v1200 = vunpack.c.l.b16 %v1185
        %v1201 = vunpack.c.l.b16 %v1186
        %v1202 = vunpack.c.l.b16 %v1187
        %v1203 = vpack.c.b16 %v1200, %v1199
        %v1204 = vpack.c.b16 %v1202, %v1201
        %v1208 = vsel %vm496, %v1183, 0
        %1210 = vmatprep.subr.bf16.mxu0 0
        %1211 = vmatpush1.bf16.msra.mxu0 0
        %1212 = vmatprep.subr.bf16.mxu0 0
        %1213 = vmatpush1.bf16.msra.mxu0 0
        %1214 = vmatprep.subr.bf16.mxu0 0
        %1215 = vmatpush1.bf16.msra.mxu0 0
        %1216 = vmatprep.subr.bf16.mxu0 0
        %1217 = vmatpush1.bf16.msra.mxu0 0
        %1218 = vmatprep.subr.bf16.mxu0 0
        %1219 = vmatpush1.bf16.msra.mxu0 0
        %1220 = vmatprep.subr.bf16.mxu0 0
        %1221 = vmatpush1.bf16.msra.mxu0 0
        %1222 = vmatprep.subr.bf16.mxu0 0
        %1223 = vmatpush1.bf16.msra.mxu0 %v1204
        %1224 = vmatprep.subr.bf16.mxu0 0
        %1225 = vmatpush1.bf16.msra.mxu0 %v1203
        %1226 = vmatprep.subr.bf16.mxu0 0
        %1227 = vmatpush2.bf16.msra.mxu0 0
        %1228 = vmatprep.subr.bf16.mxu0 0
        %1229 = vmatpush2.bf16.msra.mxu0 0
        %1230 = vmatprep.subr.bf16.mxu0 0
        %1231 = vmatpush2.bf16.msra.mxu0 0
        %1232 = vmatprep.subr.bf16.mxu0 0
        %1233 = vmatpush2.bf16.msra.mxu0 0
        %1234 = vmatprep.subr.bf16.mxu0 0
        %1235 = vmatpush2.bf16.msra.mxu0 0
        %1236 = vmatprep.subr.bf16.mxu0 0
        %1237 = vmatpush2.bf16.msra.mxu0 0
        %1238 = vmatprep.subr.bf16.mxu0 0
        %1239 = vmatpush2.bf16.msra.mxu0 0
        %1240 = vmatprep.subr.bf16.mxu0 0
        %1241 = vmatpush2.bf16.msra.mxu0 0
        %1242 = vmatprep.mubr.bf16.mxu0 0
        %1243 = vmatmul.mubr.bf16.gmra.mxu0 %v1208
        %v1244 = vpop.f32.mrf.mxu0
        %v1245 = vadd.f32 %v1193, %v1244
        %v1246 = vpop.f32.mrf.mxu0
        %v1247 = vpop.f32.mrf.mxu0
        %v1248 = vpop.f32.mrf.mxu0
        %1249 = vdwg.mxu0
        %v1250 = vmax.f32 %v1245, 0.0
        %v1251 = vpack.c.bf16 %v1250, %v1250
        %v1252 = vld [vmem:[%s9] sm:$0xf]
        %v1253 = vld [vmem:[%s9 + $0x4] sm:$0xf]
        %v1254 = vld [vmem:[%s9 + $0x8] sm:$0xf]
        %v1255 = vld [vmem:[%s9 + $0xc] sm:$0xf]
        %v1256 = vld [vmem:[%s9 + $0x10] sm:$0xf]
        %v1257 = vld [vmem:[%s9 + $0x14] sm:$0xf]
        %v1258 = vld [vmem:[%s9 + $0x18] sm:$0xf]
        %v1259 = vld [vmem:[%s9 + $0x1c] sm:$0xf]
        %v1260 = vld [vmem:[%s9 + $0x20] sm:$0xf]
        %v1261 = vld [vmem:[%s9 + $0x24] sm:$0xf]
        %v1262 = vld [vmem:[%s9 + $0x28] sm:$0xf]
        %v1263 = vld [vmem:[%s9 + $0x2c] sm:$0xf]
        %v1264 = vld [vmem:[%s9 + $0x30] sm:$0xf]
        %v1265 = vld [vmem:[%s9 + $0x34] sm:$0xf]
        %v1266 = vld [vmem:[%s9 + $0x38] sm:$0xf]
        %v1267 = vld [vmem:[%s9 + $0x3c] sm:$0xf]
        %v1268 = vld [vmem:[%s10] sm:$0x1]
        %v1270 = vlaneseq
        %v1271 = vshrl.u32 %v1270, 7
        %v1272 = vsub.s32 0, %v1271
        %v1273 = vrot.slane %v1268, %v1272
        %v1291 = vunpack.c.l.b16 %v1252
        %v1292 = vunpack.c.l.b16 %v1253
        %v1293 = vunpack.c.l.b16 %v1254
        %v1294 = vunpack.c.l.b16 %v1255
        %v1295 = vunpack.c.l.b16 %v1256
        %v1296 = vunpack.c.l.b16 %v1257
        %v1297 = vunpack.c.l.b16 %v1258
        %v1298 = vunpack.c.l.b16 %v1259
        %v1299 = vunpack.c.l.b16 %v1260
        %v1300 = vunpack.c.l.b16 %v1261
        %v1301 = vunpack.c.l.b16 %v1262
        %v1302 = vunpack.c.l.b16 %v1263
        %v1303 = vunpack.c.l.b16 %v1264
        %v1304 = vunpack.c.l.b16 %v1265
        %v1305 = vunpack.c.l.b16 %v1266
        %v1306 = vunpack.c.l.b16 %v1267
        %v1307 = vpack.c.b16 %v1292, %v1291
        %v1308 = vpack.c.b16 %v1294, %v1293
        %v1309 = vpack.c.b16 %v1296, %v1295
        %v1310 = vpack.c.b16 %v1298, %v1297
        %v1311 = vpack.c.b16 %v1300, %v1299
        %v1312 = vpack.c.b16 %v1302, %v1301
        %v1313 = vpack.c.b16 %v1304, %v1303
        %v1314 = vpack.c.b16 %v1306, %v1305
        %1323 = vmatprep.subr.bf16.mxu0 0
        %1324 = vmatpush1.bf16.msra.mxu0 %v1314
        %1325 = vmatprep.subr.bf16.mxu0 0
        %1326 = vmatpush1.bf16.msra.mxu0 %v1313
        %1327 = vmatprep.subr.bf16.mxu0 0
        %1328 = vmatpush1.bf16.msra.mxu0 %v1312
        %1329 = vmatprep.subr.bf16.mxu0 0
        %1330 = vmatpush1.bf16.msra.mxu0 %v1311
        %1331 = vmatprep.subr.bf16.mxu0 0
        %1332 = vmatpush1.bf16.msra.mxu0 %v1310
        %1333 = vmatprep.subr.bf16.mxu0 0
        %1334 = vmatpush1.bf16.msra.mxu0 %v1309
        %1335 = vmatprep.subr.bf16.mxu0 0
        %1336 = vmatpush1.bf16.msra.mxu0 %v1308
        %1337 = vmatprep.subr.bf16.mxu0 0
        %1338 = vmatpush1.bf16.msra.mxu0 %v1307
        %1339 = vmatprep.subr.bf16.mxu0 0
        %1340 = vmatpush2.bf16.msra.mxu0 0
        %1341 = vmatprep.subr.bf16.mxu0 0
        %1342 = vmatpush2.bf16.msra.mxu0 0
        %1343 = vmatprep.subr.bf16.mxu0 0
        %1344 = vmatpush2.bf16.msra.mxu0 0
        %1345 = vmatprep.subr.bf16.mxu0 0
        %1346 = vmatpush2.bf16.msra.mxu0 0
        %1347 = vmatprep.subr.bf16.mxu0 0
        %1348 = vmatpush2.bf16.msra.mxu0 0
        %1349 = vmatprep.subr.bf16.mxu0 0
        %1350 = vmatpush2.bf16.msra.mxu0 0
        %1351 = vmatprep.subr.bf16.mxu0 0
        %1352 = vmatpush2.bf16.msra.mxu0 0
        %1353 = vmatprep.subr.bf16.mxu0 0
        %1354 = vmatpush2.bf16.msra.mxu0 0
        %1355 = vmatprep.mubr.bf16.mxu0 0
        %1356 = vmatmul.mubr.bf16.gmra.mxu0 %v1251
        %v1357 = vpop.f32.mrf.mxu0
        %v1358 = vadd.f32 %v1273, %v1357
        %v1359 = vpop.f32.mrf.mxu0
        %v1360 = vpop.f32.mrf.mxu0
        %v1361 = vpop.f32.mrf.mxu0
        %1362 = vdwg.mxu0
        %v1363 = vadd.f32 %v1358, %v1182
        %v1364 = vld [vmem:[%s11] sm:$0x1]
        %v1365 = vld [vmem:[%s12] sm:$0x1]
        %v1366 = vsel %vm496, %v1363, 0.0
        %1367 = vadd.xlane.f32.xlu0 %v1366
        %v1368 = vpop.xlane.xlu0 %1367
        %v1369 = vmul.f32 %v1368, %v1158
        %v1370 = vsub.f32 %v1363, %v1369
        %v1371 = vmul.f32 %v1370, %v1370
        %v1372 = vsel %vm496, %v1371, 0.0
        %1373 = vadd.xlane.f32.xlu0 %v1372
        %v1374 = vpop.xlane.xlu0 %1373
        %v1375 = vmul.f32 %v1374, %v1158
        %v1376 = vadd.f32 %v1375, 1e-05
        %v1377 = vrsqrt.pop %v1376
        %v1378 = vmul.f32 %v1370, %v1377
        %v1380 = vlaneseq
        %v1381 = vshrl.u32 %v1380, 7
        %v1382 = vsub.s32 0, %v1381
        %v1383 = vrot.slane %v1364, %v1382
        %v1385 = vmul.f32 %v1378, %v1383
        %v1387 = vlaneseq
        %v1388 = vshrl.u32 %v1387, 7
        %v1389 = vsub.s32 0, %v1388
        %v1390 = vrot.slane %v1365, %v1389
        %v1392 = vadd.f32 %v1385, %v1390
        %1393 = vst.msk [vmem:[%s431] sm:$0xff] %vm496, %v1392
        %s1394 = sand.u32 %s313, 1
        %s1395 = scalar_lea.sflag [#allocation3], %s1394
        %s1396 = sand.u32 %s313, 1
        %s1397 = smul.addr %s1396, 8
        %s1398 = scalar_lea.vmem [#allocation2], %s1397
        // Predicated region
        $region73: #{tpu_custom_call.1} parent=71 // pred_check
          %p1399 = pneg %p323
        $region74: #{tpu_custom_call.1} parent=71 // pred_check_branch
          %1401 = sbr.rel (%p1399) target = $region76
        $region75: #{tpu_custom_call.1} parent=71 // pred_region
          %s1403 = ssub.s32 128, 128
          %1404 = vsyncadd %s1395, %s1403
          %s1405 = smul.addr %s27, 128
          %s1406 = scalar_lea.hbm %s13, %s1405
          %s1408 = sshll.u32 %s1398, 4
          %s1409 = int_to_ptr.vmem [resolvable:$true] %s1408
          %1411 = dma.vmem_to_hbm [thread:$0]  %s1409, 128, %s1406, %s1395
        $region76: #{tpu_custom_call.1} parent=71 // pred_fallthru
          _
      $region72: #{tpu_custom_call.1} parent=5 // pred_fallthru
        _
      %p1412 = scmp.le.s32.totalorder 2, %s22
      // Predicated region
      $region77: #{tpu_custom_call.1} parent=5 // pred_check
        %p1413 = pneg %p1412
      $region78: #{tpu_custom_call.1} parent=5 // pred_check_branch
        %1415 = sbr.rel (%p1413) target = $region80
      $region79: #{tpu_custom_call.1} parent=5 // pred_region
        %s1416 = ssub.s32 %s22, 2
        // Predicated region
        $region81: #{tpu_custom_call.1} parent=79 // pred_check
          %p1417 = pneg %p329
        $region82: #{tpu_custom_call.1} parent=79 // pred_check_branch
          %1419 = sbr.rel (%p1417) target = $region84
        $region83: #{tpu_custom_call.1} parent=79 // pred_region
          %s1420 = sand.u32 %s314, 1
          %s1421 = scalar_lea.sflag [#allocation3], %s1420
          %s1422 = sand.u32 %s314, 1
          %s1423 = smul.addr %s1422, 8
          %s1424 = scalar_lea.vmem [#allocation2], %s1423
          %1425 = dma.done %s1421, 128
        $region84: #{tpu_custom_call.1} parent=79 // pred_fallthru
          _
      $region80: #{tpu_custom_call.1} parent=5 // pred_fallthru
        _
    $region6: #{tpu_custom_call.1} parent=1 // loop_footer
      %s26 = sadd.s32 1, %s22
    $region7: #{tpu_custom_call.1} parent=1 // loop_footer_branch
      %21 = sbr.rel target = $region3
    $region8: #{tpu_custom_call.1} parent=1 // loop_exit
      _
    %1426 = vsyncpa [#allocation3], 1
    %s1427 = scalar_lea.sflag [#allocation3], 1
    %1428 = vsyncpa %s1427, 1

</llo_original>
